<compile_context>
chip_gen: v5e
topology: v5e:2x2
jax: 0.10.0
libtpu: 0.0.40
codegen_flags: <defaults>
</compile_context>

<pallas_src>
import functools
import math

import jax
import jax.numpy as jnp
from jax.experimental import pallas as pl
from jax.experimental.pallas import tpu as pltpu


# -----------------------------------------------------------------------------
# Small in-kernel helpers (operate on f32 values)
# -----------------------------------------------------------------------------
def _ln(x, g, b, eps):
    """LayerNorm over the last dim.  x: (S, D) f32, g/b: (1, D) f32."""
    mean = jnp.mean(x, axis=-1, keepdims=True)
    var = jnp.mean(jnp.square(x - mean), axis=-1, keepdims=True)
    return (x - mean) * jax.lax.rsqrt(var + eps) * g + b


def _softmax(s):
    """Row softmax in f32; exp on EUP, denominator via approx reciprocal."""
    m = jnp.max(s, axis=-1, keepdims=True)
    e = jnp.exp(s - m)
    return e * pl.reciprocal(jnp.sum(e, axis=-1, keepdims=True), approx=True)


# -----------------------------------------------------------------------------
# Fused text tower kernel: embed-LN + all BERT layers + CLS text projection.
# grid = (batch, layer); hidden state carried in VMEM scratch across layers.
# -----------------------------------------------------------------------------
def _text_tower_kernel(bias_ref, emb_ref, embg_ref, embb_ref,
                       wqkv_ref, bqkv_ref, wo_ref, bo_ref,
                       ln1g_ref, ln1b_ref,
                       w1_ref, b1_ref, w2_ref, b2_ref,
                       ln2g_ref, ln2b_ref,
                       wt_ref, bt_ref,
                       txt_ref,
                       h_sc, qkv_sc, ctx_sc,
                       *, num_heads, eps):
    layer = pl.program_id(1)
    n_layers = pl.num_programs(1)

    S = h_sc.shape[0]
    D = h_sc.shape[1]
    H = num_heads
    Dh = D // H
    scale = 1.0 / math.sqrt(Dh)

    # ---- embedding LayerNorm, once per batch element (layer == 0) ----
    @pl.when(layer == 0)
    def _():
        h_sc[...] = _ln(emb_ref[0].astype(jnp.float32),
                        embg_ref[...], embb_ref[...], eps)

    x = h_sc[...]                                  # (S, D) f32 residual stream
    x_bf = x.astype(jnp.bfloat16)
    bias = bias_ref[0]                             # (1, S) f32 additive mask

    # ---- fused QKV projection: single (S, 3D) bf16 matmul, f32 accumulate ----
    qkv = jnp.dot(x_bf, wqkv_ref[0], preferred_element_type=jnp.float32)
    qkv_sc[...] = (qkv + bqkv_ref[0]).astype(jnp.bfloat16)

    # ---- per-head masked attention on lane slices of the VMEM scratch ----
    # (H heads statically unrolled; Dh=32 slices stay inside VMEM.)
    for h in range(H):
        q_h = qkv_sc[:, pl.ds(h * Dh, Dh)]                 # (S, Dh) bf16
        k_h = qkv_sc[:, pl.ds(D + h * Dh, Dh)]             # (S, Dh) bf16
        v_h = qkv_sc[:, pl.ds(2 * D + h * Dh, Dh)]         # (S, Dh) bf16
        s = jax.lax.dot_general(q_h, k_h, (((1,), (1,)), ((), ())),
                                preferred_element_type=jnp.float32)  # (S, S)
        probs = _softmax(s * scale + bias)                  # f32
        ctx_sc[:, pl.ds(h * Dh, Dh)] = jnp.dot(
            probs.astype(jnp.bfloat16), v_h,
            preferred_element_type=jnp.float32)             # (S, Dh)

    # ---- output projection + fused residual + LN1 ----
    attn_out = jnp.dot(ctx_sc[...].astype(jnp.bfloat16), wo_ref[0],
                       preferred_element_type=jnp.float32) + bo_ref[0]
    h1 = _ln(attn_out + x, ln1g_ref[0], ln1b_ref[0], eps)

    # ---- FFN (GELU) + fused residual + LN2 ----
    ffn = jnp.dot(h1.astype(jnp.bfloat16), w1_ref[0],
                  preferred_element_type=jnp.float32) + b1_ref[0]
    # TODO(synk): HF BERT uses exact erf GELU; tanh-approx GELU used here since
    #             erf is not reliably lowerable in Mosaic.
    ffn = jax.nn.gelu(ffn)
    ffn = jnp.dot(ffn.astype(jnp.bfloat16), w2_ref[0],
                  preferred_element_type=jnp.float32) + b2_ref[0]
    h2 = _ln(ffn + h1, ln2g_ref[0], ln2b_ref[0], eps)

    h_sc[...] = h2                                 # carry to next layer

    # ---- last layer: CLS token -> text projection, only output to HBM ----
    @pl.when(layer == n_layers - 1)
    def _():
        cls = h2[0:1, :].astype(jnp.bfloat16)      # (1, D)
        y = jnp.dot(cls, wt_ref[...],
                    preferred_element_type=jnp.float32) + bt_ref[...]
        txt_ref[...] = y[None]                     # (1, 1, P) lane-dense store


def text_tower(token_ids, att_mask, params, num_heads, eps=1e-12):
    """Embedding + full BERT encoder + CLS text projection (one pallas_call)."""
    bert = params["bert"]
    B, S = token_ids.shape
    D = bert["word_emb"].shape[1]
    L = bert["wqkv"].shape[0]
    F = bert["w1"].shape[2]
    P = params["text_proj_w"].shape[1]

    # Embedding gather / sums stay in plain JAX (glue).  token_type_ids == 0.
    emb = (jnp.take(bert["word_emb"], token_ids, axis=0)
           + bert["pos_emb"][None, :S, :]
           + bert["type_emb"][None, 0:1, :])                       # (B, S, D) f32
    # Additive mask bias precomputed once for all layers (HF-style -10000).
    bias = ((1.0 - att_mask.astype(jnp.float32)) * -10000.0).reshape(B, 1, S)

    kernel = functools.partial(_text_tower_kernel, num_heads=num_heads, eps=eps)
    txt = pl.pallas_call(
        kernel,
        grid=(B, L),
        in_specs=[
            pl.BlockSpec((1, 1, S), lambda b, l: (b, 0, 0)),       # mask bias
            pl.BlockSpec((1, S, D), lambda b, l: (b, 0, 0)),       # embeddings
            pl.BlockSpec((1, D), lambda b, l: (0, 0)),             # emb ln gamma
            pl.BlockSpec((1, D), lambda b, l: (0, 0)),             # emb ln beta
            pl.BlockSpec((1, D, 3 * D), lambda b, l: (l, 0, 0)),   # wqkv
            pl.BlockSpec((1, 1, 3 * D), lambda b, l: (l, 0, 0)),   # bqkv
            pl.BlockSpec((1, D, D), lambda b, l: (l, 0, 0)),       # wo
            pl.BlockSpec((1, 1, D), lambda b, l: (l, 0, 0)),       # bo
            pl.BlockSpec((1, 1, D), lambda b, l: (l, 0, 0)),       # ln1 gamma
            pl.BlockSpec((1, 1, D), lambda b, l: (l, 0, 0)),       # ln1 beta
            pl.BlockSpec((1, D, F), lambda b, l: (l, 0, 0)),       # w1
            pl.BlockSpec((1, 1, F), lambda b, l: (l, 0, 0)),       # b1
            pl.BlockSpec((1, F, D), lambda b, l: (l, 0, 0)),       # w2
            pl.BlockSpec((1, 1, D), lambda b, l: (l, 0, 0)),       # b2
            pl.BlockSpec((1, 1, D), lambda b, l: (l, 0, 0)),       # ln2 gamma
            pl.BlockSpec((1, 1, D), lambda b, l: (l, 0, 0)),       # ln2 beta
            pl.BlockSpec((D, P), lambda b, l: (0, 0)),             # text proj w
            pl.BlockSpec((1, P), lambda b, l: (0, 0)),             # text proj b
        ],
        out_specs=pl.BlockSpec((1, 1, P), lambda b, l: (b, 0, 0)),
        out_shape=jax.ShapeDtypeStruct((B, 1, P), jnp.float32),
        scratch_shapes=[
            pltpu.VMEM((S, D), jnp.float32),        # hidden-state carry
            pltpu.VMEM((S, 3 * D), jnp.bfloat16),   # fused QKV activations
            pltpu.VMEM((S, D), jnp.float32),        # merged attention context
        ],
        compiler_params=pltpu.CompilerParams(
            dimension_semantics=("parallel", "arbitrary")),
    )(bias, emb, bert["emb_ln_g"], bert["emb_ln_b"],
      bert["wqkv"], bert["bqkv"], bert["wo"], bert["bo"],
      bert["ln1_g"], bert["ln1_b"], bert["w1"], bert["b1"],
      bert["w2"], bert["b2"], bert["ln2_g"], bert["ln2_b"],
      params["text_proj_w"], params["text_proj_b"])
    return txt[:, 0, :]                            # (B, P) f32


# -----------------------------------------------------------------------------
# Projection linear kernel (bf16 matmul, f32 out) -- codex projection
# -----------------------------------------------------------------------------
def _linear_kernel(x_ref, w_ref, b_ref, o_ref):
    y = jnp.dot(x_ref[...], w_ref[...], preferred_element_type=jnp.float32)
    o_ref[...] = (y + b_ref[...]).astype(o_ref.dtype)


def linear(x, w, b):
    """y = x @ w + b   (w stored as (in, out) == PyTorch weight.T, bf16)."""
    M, K = x.shape
    N = w.shape[1]
    return pl.pallas_call(
        _linear_kernel,
        grid=(1,),
        in_specs=[
            pl.BlockSpec((M, K), lambda i: (0, 0)),
            pl.BlockSpec((K, N), lambda i: (0, 0)),
            pl.BlockSpec((1, N), lambda i: (0, 0)),
        ],
        out_specs=pl.BlockSpec((M, N), lambda i: (0, 0)),
        out_shape=jax.ShapeDtypeStruct((M, N), jnp.float32),
    )(x, w, b)


# -----------------------------------------------------------------------------
# BaseCodexCLIP forward
# -----------------------------------------------------------------------------
def base_codex_clip_forward(data, codex_features, params, num_heads):
    image_features = linear(codex_features.astype(jnp.bfloat16),
                            params["codex_proj_w"], params["codex_proj_b"])
    text_features = text_tower(data["text"], data["att_mask"],
                               params, num_heads)
    return {"codex": image_features, "text": text_features}


# -----------------------------------------------------------------------------
# Deterministic parameter construction (Xavier linears, zero biases)
# -----------------------------------------------------------------------------
def xavier_uniform(key, fan_in, fan_out):
    limit = math.sqrt(6.0 / (fan_in + fan_out))
    # stored as (in, out) == PyTorch nn.Linear weight transposed
    return jax.random.uniform(key, (fan_in, fan_out), jnp.float32, -limit, limit)


def make_params(key, *, vocab, max_pos, text_dim, codex_dim, proj_dim,
                num_layers, ffn_dim):
    keys = iter(jax.random.split(key, 16 + 8 * num_layers))
    D = text_dim
    layer_lists = {k: [] for k in
                   ("wqkv", "bqkv", "wo", "bo", "ln1_g", "ln1_b",
                    "w1", "b1", "w2", "b2", "ln2_g", "ln2_b")}
    for _ in range(num_layers):
        wq = xavier_uniform(next(keys), D, D)
        wk = xavier_uniform(next(keys), D, D)
        wv = xavier_uniform(next(keys), D, D)
        layer_lists["wqkv"].append(
            jnp.concatenate([wq, wk, wv], axis=1).astype(jnp.bfloat16))
        layer_lists["bqkv"].append(jnp.zeros((1, 3 * D), jnp.float32))
        layer_lists["wo"].append(
            xavier_uniform(next(keys), D, D).astype(jnp.bfloat16))
        layer_lists["bo"].append(jnp.zeros((1, D), jnp.float32))
        layer_lists["ln1_g"].append(jnp.ones((1, D), jnp.float32))
        layer_lists["ln1_b"].append(jnp.zeros((1, D), jnp.float32))
        layer_lists["w1"].append(
            xavier_uniform(next(keys), D, ffn_dim).astype(jnp.bfloat16))
        layer_lists["b1"].append(jnp.zeros((1, ffn_dim), jnp.float32))
        layer_lists["w2"].append(
            xavier_uniform(next(keys), ffn_dim, D).astype(jnp.bfloat16))
        layer_lists["b2"].append(jnp.zeros((1, D), jnp.float32))
        layer_lists["ln2_g"].append(jnp.ones((1, D), jnp.float32))
        layer_lists["ln2_b"].append(jnp.zeros((1, D), jnp.float32))

    bert = {
        "word_emb": 0.02 * jax.random.normal(next(keys), (vocab, D), jnp.float32),
        "pos_emb": 0.02 * jax.random.normal(next(keys), (max_pos, D), jnp.float32),
        "type_emb": 0.02 * jax.random.normal(next(keys), (2, D), jnp.float32),
        "emb_ln_g": jnp.ones((1, D), jnp.float32),
        "emb_ln_b": jnp.zeros((1, D), jnp.float32),
    }
    # stack layer params along a leading L axis for the single fused kernel
    for k, v in layer_lists.items():
        bert[k] = jnp.stack(v, axis=0)

    params = {
        "bert": bert,
        # shared_projection=False (default): two independent Xavier-init Linears
        "codex_proj_w": xavier_uniform(next(keys), codex_dim, proj_dim).astype(jnp.bfloat16),
        "codex_proj_b": jnp.zeros((1, proj_dim), jnp.float32),
        "text_proj_w": xavier_uniform(next(keys), text_dim, proj_dim).astype(jnp.bfloat16),
        "text_proj_b": jnp.zeros((1, proj_dim), jnp.float32),
    }
    return params


# -----------------------------------------------------------------------------
if __name__ == "__main__":
    # Small, TPU-friendly config consistent with the module's forward pass.
    BATCH, SEQ = 2, 8
    CODEX_DIM, TEXT_DIM, PROJ_DIM = 128, 128, 128
    NUM_HEADS, NUM_LAYERS, FFN_DIM = 4, 2, 256
    VOCAB, MAX_POS = 100, 32

    root = jax.random.PRNGKey(0)
    k_param, k_codex, k_tok = jax.random.split(root, 3)

    params = make_params(k_param, vocab=VOCAB, max_pos=MAX_POS,
                         text_dim=TEXT_DIM, codex_dim=CODEX_DIM,
                         proj_dim=PROJ_DIM, num_layers=NUM_LAYERS,
                         ffn_dim=FFN_DIM)

    codex_features = jax.random.normal(k_codex, (BATCH, CODEX_DIM), jnp.float32)
    token_ids = jax.random.randint(k_tok, (BATCH, SEQ), 0, VOCAB, jnp.int32)
    att_mask = jnp.ones((BATCH, SEQ), jnp.int32).at[1, 6:].set(0)  # pad tail of sample 1

    data = {"text": token_ids, "att_mask": att_mask}

    fwd = jax.jit(functools.partial(base_codex_clip_forward,
                                    num_heads=NUM_HEADS))
    out = fwd(data, codex_features, params)
    jax.block_until_ready(out["codex"])
    jax.block_until_ready(out["text"])

    assert out["codex"].shape == (BATCH, PROJ_DIM)
    assert out["text"].shape == (BATCH, PROJ_DIM)
    assert bool(jnp.all(jnp.isfinite(out["codex"])))
    assert bool(jnp.all(jnp.isfinite(out["text"])))
    print("KERNEL_OK")
</pallas_src>

<mosaic_0001>
module attributes {stable_mosaic.version = 11 : i64} {
  func.func @_linear_kernel(%arg0: i32, %arg1: memref<2x128xbf16, #tpu.memory_space<vmem>>, %arg2: memref<128x128xbf16, #tpu.memory_space<vmem>>, %arg3: memref<1x128xf32, #tpu.memory_space<vmem>>, %arg4: memref<2x128xf32, #tpu.memory_space<vmem>>) attributes {dimension_semantics = [#tpu.dimension_semantics<arbitrary>], iteration_bounds = array<i64: 1>, scalar_prefetch = 0 : i64, scratch_operands = 0 : i64, tpu.core_type = #tpu.core_type<tc>, window_params = [{pipeline_mode = #tpu.pipeline_mode<synchronous>, transform_indices = @transform_0, window_bounds = array<i64: 2, 128>}, {pipeline_mode = #tpu.pipeline_mode<synchronous>, transform_indices = @transform_1, window_bounds = array<i64: 128, 128>}, {pipeline_mode = #tpu.pipeline_mode<synchronous>, transform_indices = @transform_2, window_bounds = array<i64: 1, 128>}, {pipeline_mode = #tpu.pipeline_mode<synchronous>, transform_indices = @transform_3, window_bounds = array<i64: 2, 128>}]} {
    %c0 = arith.constant 0 : index
    %c0_0 = arith.constant 0 : index
    %0 = vector.load %arg1[%c0, %c0_0] : memref<2x128xbf16, #tpu.memory_space<vmem>>, vector<2x128xbf16>
    %c0_1 = arith.constant 0 : index
    %c0_2 = arith.constant 0 : index
    %1 = vector.load %arg2[%c0_1, %c0_2] : memref<128x128xbf16, #tpu.memory_space<vmem>>, vector<128x128xbf16>
    %cst = arith.constant dense<0.000000e+00> : vector<2x128xf32>
    %2 = tpu.matmul %0, %1, %cst {dimension_numbers = #tpu.dot_dimension_numbers<[1], [0], [0], [1], [0, 0, 1, 1], [], []>} : vector<2x128xbf16>, vector<128x128xbf16>, vector<2x128xf32> -> vector<2x128xf32>
    %c0_3 = arith.constant 0 : index
    %c0_4 = arith.constant 0 : index
    %3 = vector.load %arg3[%c0_3, %c0_4] : memref<1x128xf32, #tpu.memory_space<vmem>>, vector<1x128xf32>
    %4 = vector.broadcast %3 : vector<1x128xf32> to vector<2x128xf32>
    %5 = arith.addf %2, %4 : vector<2x128xf32>
    %c0_5 = arith.constant 0 : index
    %c0_6 = arith.constant 0 : index
    %6 = vector.load %arg4[%c0_5, %c0_6] : memref<2x128xf32, #tpu.memory_space<vmem>>, vector<2x128xf32>
    tpu.vector_store %arg4[%c0_5, %c0_6], %5 {strides = array<i32>} : memref<2x128xf32, #tpu.memory_space<vmem>>, vector<2x128xf32>,
    return
  }
  func.func @transform_0(%arg0: i32) -> (i32, i32) {
    %c0_i32 = arith.constant 0 : i32
    %c0_i32_0 = arith.constant 0 : i32
    %c0_i32_1 = arith.constant 0 : i32
    return %c0_i32, %c0_i32_0 : i32, i32
  }
  func.func @transform_1(%arg0: i32) -> (i32, i32) {
    %c0_i32 = arith.constant 0 : i32
    %c0_i32_0 = arith.constant 0 : i32
    %c0_i32_1 = arith.constant 0 : i32
    return %c0_i32, %c0_i32_0 : i32, i32
  }
  func.func @transform_2(%arg0: i32) -> (i32, i32) {
    %c0_i32 = arith.constant 0 : i32
    %c0_i32_0 = arith.constant 0 : i32
    %c0_i32_1 = arith.constant 0 : i32
    return %c0_i32, %c0_i32_0 : i32, i32
  }
  func.func @transform_3(%arg0: i32) -> (i32, i32) {
    %c0_i32 = arith.constant 0 : i32
    %c0_i32_0 = arith.constant 0 : i32
    %c0_i32_1 = arith.constant 0 : i32
    return %c0_i32, %c0_i32_0 : i32, i32
  }
}

module attributes {stable_mosaic.version = 11 : i64} {
  func.func @_text_tower_kernel(%arg0: i32, %arg1: i32, %arg2: memref<1x1x8xf32, #tpu.memory_space<vmem>>, %arg3: memref<1x8x128xf32, #tpu.memory_space<vmem>>, %arg4: memref<1x128xf32, #tpu.memory_space<vmem>>, %arg5: memref<1x128xf32, #tpu.memory_space<vmem>>, %arg6: memref<1x128x384xbf16, #tpu.memory_space<vmem>>, %arg7: memref<1x1x384xf32, #tpu.memory_space<vmem>>, %arg8: memref<1x128x128xbf16, #tpu.memory_space<vmem>>, %arg9: memref<1x1x128xf32, #tpu.memory_space<vmem>>, %arg10: memref<1x1x128xf32, #tpu.memory_space<vmem>>, %arg11: memref<1x1x128xf32, #tpu.memory_space<vmem>>, %arg12: memref<1x128x256xbf16, #tpu.memory_space<vmem>>, %arg13: memref<1x1x256xf32, #tpu.memory_space<vmem>>, %arg14: memref<1x256x128xbf16, #tpu.memory_space<vmem>>, %arg15: memref<1x1x128xf32, #tpu.memory_space<vmem>>, %arg16: memref<1x1x128xf32, #tpu.memory_space<vmem>>, %arg17: memref<1x1x128xf32, #tpu.memory_space<vmem>>, %arg18: memref<128x128xbf16, #tpu.memory_space<vmem>>, %arg19: memref<1x128xf32, #tpu.memory_space<vmem>>, %arg20: memref<1x1x128xf32, #tpu.memory_space<vmem>>, %arg21: memref<8x128xf32, #tpu.memory_space<vmem>>, %arg22: memref<8x384xbf16, #tpu.memory_space<vmem>>, %arg23: memref<8x128xf32, #tpu.memory_space<vmem>>) attributes {dimension_semantics = [#tpu.dimension_semantics<parallel>, #tpu.dimension_semantics<arbitrary>], iteration_bounds = array<i64: 2, 2>, scalar_prefetch = 0 : i64, scratch_operands = 3 : i64, tpu.core_type = #tpu.core_type<tc>, window_params = [{transform_indices = @transform_0, window_bounds = array<i64: 1, 1, 8>}, {transform_indices = @transform_1, window_bounds = array<i64: 1, 8, 128>}, {pipeline_mode = #tpu.pipeline_mode<synchronous>, transform_indices = @transform_2, window_bounds = array<i64: 1, 128>}, {pipeline_mode = #tpu.pipeline_mode<synchronous>, transform_indices = @transform_3, window_bounds = array<i64: 1, 128>}, {transform_indices = @transform_4, window_bounds = array<i64: 1, 128, 384>}, {transform_indices = @transform_5, window_bounds = array<i64: 1, 1, 384>}, {transform_indices = @transform_6, window_bounds = array<i64: 1, 128, 128>}, {transform_indices = @transform_7, window_bounds = array<i64: 1, 1, 128>}, {transform_indices = @transform_8, window_bounds = array<i64: 1, 1, 128>}, {transform_indices = @transform_9, window_bounds = array<i64: 1, 1, 128>}, {transform_indices = @transform_10, window_bounds = array<i64: 1, 128, 256>}, {transform_indices = @transform_11, window_bounds = array<i64: 1, 1, 256>}, {transform_indices = @transform_12, window_bounds = array<i64: 1, 256, 128>}, {transform_indices = @transform_13, window_bounds = array<i64: 1, 1, 128>}, {transform_indices = @transform_14, window_bounds = array<i64: 1, 1, 128>}, {transform_indices = @transform_15, window_bounds = array<i64: 1, 1, 128>}, {pipeline_mode = #tpu.pipeline_mode<synchronous>, transform_indices = @transform_16, window_bounds = array<i64: 128, 128>}, {pipeline_mode = #tpu.pipeline_mode<synchronous>, transform_indices = @transform_17, window_bounds = array<i64: 1, 128>}, {transform_indices = @transform_18, window_bounds = array<i64: 1, 1, 128>}]} {
    %c0_i32 = arith.constant 0 : i32
    %0 = arith.cmpi eq, %arg1, %c0_i32 : i32
    %1 = arith.extui %0 : i1 to i32
    %c0_i32_0 = arith.constant 0 : i32
    %2 = arith.cmpi ne, %1, %c0_i32_0 : i32
    scf.if %2 {
      %c0_106 = arith.constant 0 : index
      %c0_107 = arith.constant 0 : index
      %c0_108 = arith.constant 0 : index
      %196 = vector.load %arg3[%c0_106, %c0_107, %c0_108] : memref<1x8x128xf32, #tpu.memory_space<vmem>>, vector<1x8x128xf32>
      %197 = vector.shape_cast %196 : vector<1x8x128xf32> to vector<8x128xf32>
      %c0_109 = arith.constant 0 : index
      %c0_110 = arith.constant 0 : index
      %198 = vector.load %arg4[%c0_109, %c0_110] : memref<1x128xf32, #tpu.memory_space<vmem>>, vector<1x128xf32>
      %c0_111 = arith.constant 0 : index
      %c0_112 = arith.constant 0 : index
      %199 = vector.load %arg5[%c0_111, %c0_112] : memref<1x128xf32, #tpu.memory_space<vmem>>, vector<1x128xf32>
      %cst_113 = arith.constant dense<0.000000e+00> : vector<8xf32>
      %200 = vector.multi_reduction <add>, %197, %cst_113 [1] : vector<8x128xf32> to vector<8xf32>
      %201 = vector.shape_cast %200 : vector<8xf32> to vector<8x1xf32>
      %cst_114 = arith.constant 1.280000e+02 : f32
      %202 = vector.broadcast %cst_114 : f32 to vector<8x1xf32>
      %203 = arith.divf %201, %202 : vector<8x1xf32>
      %204 = vector.broadcast %203 : vector<8x1xf32> to vector<8x128xf32>
      %205 = arith.subf %197, %204 : vector<8x128xf32>
      %206 = arith.mulf %205, %205 : vector<8x128xf32>
      %cst_115 = arith.constant dense<0.000000e+00> : vector<8xf32>
      %207 = vector.multi_reduction <add>, %206, %cst_115 [1] : vector<8x128xf32> to vector<8xf32>
      %208 = vector.shape_cast %207 : vector<8xf32> to vector<8x1xf32>
      %cst_116 = arith.constant 1.280000e+02 : f32
      %209 = vector.broadcast %cst_116 : f32 to vector<8x1xf32>
      %210 = arith.divf %208, %209 : vector<8x1xf32>
      %211 = vector.broadcast %203 : vector<8x1xf32> to vector<8x128xf32>
      %212 = arith.subf %197, %211 : vector<8x128xf32>
      %cst_117 = arith.constant 9.99999996E-13 : f32
      %213 = vector.broadcast %cst_117 : f32 to vector<8x1xf32>
      %214 = arith.addf %210, %213 : vector<8x1xf32>
      %215 = math.rsqrt %214 : vector<8x1xf32>
      %216 = vector.broadcast %215 : vector<8x1xf32> to vector<8x128xf32>
      %217 = arith.mulf %212, %216 : vector<8x128xf32>
      %218 = vector.broadcast %198 : vector<1x128xf32> to vector<8x128xf32>
      %219 = arith.mulf %217, %218 : vector<8x128xf32>
      %220 = vector.broadcast %199 : vector<1x128xf32> to vector<8x128xf32>
      %221 = arith.addf %219, %220 : vector<8x128xf32>
      %c0_118 = arith.constant 0 : index
      %c0_119 = arith.constant 0 : index
      %222 = vector.load %arg21[%c0_118, %c0_119] : memref<8x128xf32, #tpu.memory_space<vmem>>, vector<8x128xf32>
      tpu.vector_store %arg21[%c0_118, %c0_119], %221 {strides = array<i32>} : memref<8x128xf32, #tpu.memory_space<vmem>>, vector<8x128xf32>,
    } else {
    }
    %c0 = arith.constant 0 : index
    %c0_1 = arith.constant 0 : index
    %3 = vector.load %arg21[%c0, %c0_1] : memref<8x128xf32, #tpu.memory_space<vmem>>, vector<8x128xf32>
    %4 = arith.truncf %3 : vector<8x128xf32> to vector<8x128xbf16>
    %c0_2 = arith.constant 0 : index
    %c0_3 = arith.constant 0 : index
    %c0_4 = arith.constant 0 : index
    %5 = vector.load %arg2[%c0_2, %c0_3, %c0_4] : memref<1x1x8xf32, #tpu.memory_space<vmem>>, vector<1x1x8xf32>
    %6 = vector.shape_cast %5 : vector<1x1x8xf32> to vector<1x8xf32>
    %c0_5 = arith.constant 0 : index
    %c0_6 = arith.constant 0 : index
    %c0_7 = arith.constant 0 : index
    %7 = vector.load %arg6[%c0_5, %c0_6, %c0_7] : memref<1x128x384xbf16, #tpu.memory_space<vmem>>, vector<1x128x384xbf16>
    %8 = vector.shape_cast %7 : vector<1x128x384xbf16> to vector<128x384xbf16>
    %cst = arith.constant dense<0.000000e+00> : vector<8x384xf32>
    %9 = tpu.matmul %4, %8, %cst {dimension_numbers = #tpu.dot_dimension_numbers<[1], [0], [0], [1], [0, 0, 1, 1], [], []>} : vector<8x128xbf16>, vector<128x384xbf16>, vector<8x384xf32> -> vector<8x384xf32>
    %c0_8 = arith.constant 0 : index
    %c0_9 = arith.constant 0 : index
    %c0_10 = arith.constant 0 : index
    %10 = vector.load %arg7[%c0_8, %c0_9, %c0_10] : memref<1x1x384xf32, #tpu.memory_space<vmem>>, vector<1x1x384xf32>
    %11 = vector.shape_cast %10 : vector<1x1x384xf32> to vector<1x384xf32>
    %12 = vector.broadcast %11 : vector<1x384xf32> to vector<8x384xf32>
    %13 = arith.addf %9, %12 : vector<8x384xf32>
    %14 = arith.truncf %13 : vector<8x384xf32> to vector<8x384xbf16>
    %c0_11 = arith.constant 0 : index
    %c0_12 = arith.constant 0 : index
    %15 = vector.load %arg22[%c0_11, %c0_12] : memref<8x384xbf16, #tpu.memory_space<vmem>>, vector<8x384xbf16>
    tpu.vector_store %arg22[%c0_11, %c0_12], %14 {strides = array<i32>} : memref<8x384xbf16, #tpu.memory_space<vmem>>, vector<8x384xbf16>,
    %c0_13 = arith.constant 0 : index
    %c0_14 = arith.constant 0 : index
    %16 = vector.load %arg22[%c0_13, %c0_14] : memref<8x384xbf16, #tpu.memory_space<vmem>>, vector<8x32xbf16>
    %c0_15 = arith.constant 0 : index
    %c128 = arith.constant 128 : index
    %17 = vector.load %arg22[%c0_15, %c128] : memref<8x384xbf16, #tpu.memory_space<vmem>>, vector<8x32xbf16>
    %c0_16 = arith.constant 0 : index
    %c256 = arith.constant 256 : index
    %18 = vector.load %arg22[%c0_16, %c256] : memref<8x384xbf16, #tpu.memory_space<vmem>>, vector<8x32xbf16>
    %cst_17 = arith.constant dense<0.000000e+00> : vector<8x8xf32>
    %19 = tpu.matmul %16, %17, %cst_17 {dimension_numbers = #tpu.dot_dimension_numbers<[1], [1], [0], [0], [0, 0, 1, 0], [], []>} : vector<8x32xbf16>, vector<8x32xbf16>, vector<8x8xf32> -> vector<8x8xf32>
    %cst_18 = arith.constant 0.176776692 : f32
    %20 = vector.broadcast %cst_18 : f32 to vector<8x8xf32>
    %21 = arith.mulf %19, %20 : vector<8x8xf32>
    %22 = vector.broadcast %6 : vector<1x8xf32> to vector<8x8xf32>
    %23 = arith.addf %21, %22 : vector<8x8xf32>
    %cst_19 = arith.constant dense<0xFF800000> : vector<8xf32>
    %24 = vector.multi_reduction <maximumf>, %23, %cst_19 [1] : vector<8x8xf32> to vector<8xf32>
    %25 = vector.shape_cast %24 : vector<8xf32> to vector<8x1xf32>
    %26 = vector.broadcast %25 : vector<8x1xf32> to vector<8x8xf32>
    %27 = arith.subf %23, %26 : vector<8x8xf32>
    %28 = math.exp %27 : vector<8x8xf32>
    %cst_20 = arith.constant dense<0.000000e+00> : vector<8xf32>
    %29 = vector.multi_reduction <add>, %28, %cst_20 [1] : vector<8x8xf32> to vector<8xf32>
    %30 = vector.shape_cast %29 : vector<8xf32> to vector<8x1xf32>
    %31 = tpu.reciprocal %30 {approx = true} : vector<8x1xf32> -> vector<8x1xf32>
    %32 = vector.broadcast %31 : vector<8x1xf32> to vector<8x8xf32>
    %33 = arith.mulf %28, %32 : vector<8x8xf32>
    %34 = arith.truncf %33 : vector<8x8xf32> to vector<8x8xbf16>
    %cst_21 = arith.constant dense<0.000000e+00> : vector<8x32xf32>
    %35 = tpu.matmul %34, %18, %cst_21 {dimension_numbers = #tpu.dot_dimension_numbers<[1], [0], [0], [1], [0, 0, 1, 1], [], []>} : vector<8x8xbf16>, vector<8x32xbf16>, vector<8x32xf32> -> vector<8x32xf32>
    %c0_22 = arith.constant 0 : index
    %c0_23 = arith.constant 0 : index
    %36 = vector.load %arg23[%c0_22, %c0_23] : memref<8x128xf32, #tpu.memory_space<vmem>>, vector<8x32xf32>
    tpu.vector_store %arg23[%c0_22, %c0_23], %35 {strides = array<i32>} : memref<8x128xf32, #tpu.memory_space<vmem>>, vector<8x32xf32>,
    %c0_24 = arith.constant 0 : index
    %c32 = arith.constant 32 : index
    %37 = vector.load %arg22[%c0_24, %c32] : memref<8x384xbf16, #tpu.memory_space<vmem>>, vector<8x32xbf16>
    %c0_25 = arith.constant 0 : index
    %c160 = arith.constant 160 : index
    %38 = vector.load %arg22[%c0_25, %c160] : memref<8x384xbf16, #tpu.memory_space<vmem>>, vector<8x32xbf16>
    %c0_26 = arith.constant 0 : index
    %c288 = arith.constant 288 : index
    %39 = vector.load %arg22[%c0_26, %c288] : memref<8x384xbf16, #tpu.memory_space<vmem>>, vector<8x32xbf16>
    %cst_27 = arith.constant dense<0.000000e+00> : vector<8x8xf32>
    %40 = tpu.matmul %37, %38, %cst_27 {dimension_numbers = #tpu.dot_dimension_numbers<[1], [1], [0], [0], [0, 0, 1, 0], [], []>} : vector<8x32xbf16>, vector<8x32xbf16>, vector<8x8xf32> -> vector<8x8xf32>
    %cst_28 = arith.constant 0.176776692 : f32
    %41 = vector.broadcast %cst_28 : f32 to vector<8x8xf32>
    %42 = arith.mulf %40, %41 : vector<8x8xf32>
    %43 = vector.broadcast %6 : vector<1x8xf32> to vector<8x8xf32>
    %44 = arith.addf %42, %43 : vector<8x8xf32>
    %cst_29 = arith.constant dense<0xFF800000> : vector<8xf32>
    %45 = vector.multi_reduction <maximumf>, %44, %cst_29 [1] : vector<8x8xf32> to vector<8xf32>
    %46 = vector.shape_cast %45 : vector<8xf32> to vector<8x1xf32>
    %47 = vector.broadcast %46 : vector<8x1xf32> to vector<8x8xf32>
    %48 = arith.subf %44, %47 : vector<8x8xf32>
    %49 = math.exp %48 : vector<8x8xf32>
    %cst_30 = arith.constant dense<0.000000e+00> : vector<8xf32>
    %50 = vector.multi_reduction <add>, %49, %cst_30 [1] : vector<8x8xf32> to vector<8xf32>
    %51 = vector.shape_cast %50 : vector<8xf32> to vector<8x1xf32>
    %52 = tpu.reciprocal %51 {approx = true} : vector<8x1xf32> -> vector<8x1xf32>
    %53 = vector.broadcast %52 : vector<8x1xf32> to vector<8x8xf32>
    %54 = arith.mulf %49, %53 : vector<8x8xf32>
    %55 = arith.truncf %54 : vector<8x8xf32> to vector<8x8xbf16>
    %cst_31 = arith.constant dense<0.000000e+00> : vector<8x32xf32>
    %56 = tpu.matmul %55, %39, %cst_31 {dimension_numbers = #tpu.dot_dimension_numbers<[1], [0], [0], [1], [0, 0, 1, 1], [], []>} : vector<8x8xbf16>, vector<8x32xbf16>, vector<8x32xf32> -> vector<8x32xf32>
    %c0_32 = arith.constant 0 : index
    %c32_33 = arith.constant 32 : index
    %57 = vector.load %arg23[%c0_32, %c32_33] : memref<8x128xf32, #tpu.memory_space<vmem>>, vector<8x32xf32>
    tpu.vector_store %arg23[%c0_32, %c32_33], %56 {strides = array<i32>} : memref<8x128xf32, #tpu.memory_space<vmem>>, vector<8x32xf32>,
    %c0_34 = arith.constant 0 : index
    %c64 = arith.constant 64 : index
    %58 = vector.load %arg22[%c0_34, %c64] : memref<8x384xbf16, #tpu.memory_space<vmem>>, vector<8x32xbf16>
    %c0_35 = arith.constant 0 : index
    %c192 = arith.constant 192 : index
    %59 = vector.load %arg22[%c0_35, %c192] : memref<8x384xbf16, #tpu.memory_space<vmem>>, vector<8x32xbf16>
    %c0_36 = arith.constant 0 : index
    %c320 = arith.constant 320 : index
    %60 = vector.load %arg22[%c0_36, %c320] : memref<8x384xbf16, #tpu.memory_space<vmem>>, vector<8x32xbf16>
    %cst_37 = arith.constant dense<0.000000e+00> : vector<8x8xf32>
    %61 = tpu.matmul %58, %59, %cst_37 {dimension_numbers = #tpu.dot_dimension_numbers<[1], [1], [0], [0], [0, 0, 1, 0], [], []>} : vector<8x32xbf16>, vector<8x32xbf16>, vector<8x8xf32> -> vector<8x8xf32>
    %cst_38 = arith.constant 0.176776692 : f32
    %62 = vector.broadcast %cst_38 : f32 to vector<8x8xf32>
    %63 = arith.mulf %61, %62 : vector<8x8xf32>
    %64 = vector.broadcast %6 : vector<1x8xf32> to vector<8x8xf32>
    %65 = arith.addf %63, %64 : vector<8x8xf32>
    %cst_39 = arith.constant dense<0xFF800000> : vector<8xf32>
    %66 = vector.multi_reduction <maximumf>, %65, %cst_39 [1] : vector<8x8xf32> to vector<8xf32>
    %67 = vector.shape_cast %66 : vector<8xf32> to vector<8x1xf32>
    %68 = vector.broadcast %67 : vector<8x1xf32> to vector<8x8xf32>
    %69 = arith.subf %65, %68 : vector<8x8xf32>
    %70 = math.exp %69 : vector<8x8xf32>
    %cst_40 = arith.constant dense<0.000000e+00> : vector<8xf32>
    %71 = vector.multi_reduction <add>, %70, %cst_40 [1] : vector<8x8xf32> to vector<8xf32>
    %72 = vector.shape_cast %71 : vector<8xf32> to vector<8x1xf32>
    %73 = tpu.reciprocal %72 {approx = true} : vector<8x1xf32> -> vector<8x1xf32>
    %74 = vector.broadcast %73 : vector<8x1xf32> to vector<8x8xf32>
    %75 = arith.mulf %70, %74 : vector<8x8xf32>
    %76 = arith.truncf %75 : vector<8x8xf32> to vector<8x8xbf16>
    %cst_41 = arith.constant dense<0.000000e+00> : vector<8x32xf32>
    %77 = tpu.matmul %76, %60, %cst_41 {dimension_numbers = #tpu.dot_dimension_numbers<[1], [0], [0], [1], [0, 0, 1, 1], [], []>} : vector<8x8xbf16>, vector<8x32xbf16>, vector<8x32xf32> -> vector<8x32xf32>
    %c0_42 = arith.constant 0 : index
    %c64_43 = arith.constant 64 : index
    %78 = vector.load %arg23[%c0_42, %c64_43] : memref<8x128xf32, #tpu.memory_space<vmem>>, vector<8x32xf32>
    tpu.vector_store %arg23[%c0_42, %c64_43], %77 {strides = array<i32>} : memref<8x128xf32, #tpu.memory_space<vmem>>, vector<8x32xf32>,
    %c0_44 = arith.constant 0 : index
    %c96 = arith.constant 96 : index
    %79 = vector.load %arg22[%c0_44, %c96] : memref<8x384xbf16, #tpu.memory_space<vmem>>, vector<8x32xbf16>
    %c0_45 = arith.constant 0 : index
    %c224 = arith.constant 224 : index
    %80 = vector.load %arg22[%c0_45, %c224] : memref<8x384xbf16, #tpu.memory_space<vmem>>, vector<8x32xbf16>
    %c0_46 = arith.constant 0 : index
    %c352 = arith.constant 352 : index
    %81 = vector.load %arg22[%c0_46, %c352] : memref<8x384xbf16, #tpu.memory_space<vmem>>, vector<8x32xbf16>
    %cst_47 = arith.constant dense<0.000000e+00> : vector<8x8xf32>
    %82 = tpu.matmul %79, %80, %cst_47 {dimension_numbers = #tpu.dot_dimension_numbers<[1], [1], [0], [0], [0, 0, 1, 0], [], []>} : vector<8x32xbf16>, vector<8x32xbf16>, vector<8x8xf32> -> vector<8x8xf32>
    %cst_48 = arith.constant 0.176776692 : f32
    %83 = vector.broadcast %cst_48 : f32 to vector<8x8xf32>
    %84 = arith.mulf %82, %83 : vector<8x8xf32>
    %85 = vector.broadcast %6 : vector<1x8xf32> to vector<8x8xf32>
    %86 = arith.addf %84, %85 : vector<8x8xf32>
    %cst_49 = arith.constant dense<0xFF800000> : vector<8xf32>
    %87 = vector.multi_reduction <maximumf>, %86, %cst_49 [1] : vector<8x8xf32> to vector<8xf32>
    %88 = vector.shape_cast %87 : vector<8xf32> to vector<8x1xf32>
    %89 = vector.broadcast %88 : vector<8x1xf32> to vector<8x8xf32>
    %90 = arith.subf %86, %89 : vector<8x8xf32>
    %91 = math.exp %90 : vector<8x8xf32>
    %cst_50 = arith.constant dense<0.000000e+00> : vector<8xf32>
    %92 = vector.multi_reduction <add>, %91, %cst_50 [1] : vector<8x8xf32> to vector<8xf32>
    %93 = vector.shape_cast %92 : vector<8xf32> to vector<8x1xf32>
    %94 = tpu.reciprocal %93 {approx = true} : vector<8x1xf32> -> vector<8x1xf32>
    %95 = vector.broadcast %94 : vector<8x1xf32> to vector<8x8xf32>
    %96 = arith.mulf %91, %95 : vector<8x8xf32>
    %97 = arith.truncf %96 : vector<8x8xf32> to vector<8x8xbf16>
    %cst_51 = arith.constant dense<0.000000e+00> : vector<8x32xf32>
    %98 = tpu.matmul %97, %81, %cst_51 {dimension_numbers = #tpu.dot_dimension_numbers<[1], [0], [0], [1], [0, 0, 1, 1], [], []>} : vector<8x8xbf16>, vector<8x32xbf16>, vector<8x32xf32> -> vector<8x32xf32>
    %c0_52 = arith.constant 0 : index
    %c96_53 = arith.constant 96 : index
    %99 = vector.load %arg23[%c0_52, %c96_53] : memref<8x128xf32, #tpu.memory_space<vmem>>, vector<8x32xf32>
    tpu.vector_store %arg23[%c0_52, %c96_53], %98 {strides = array<i32>} : memref<8x128xf32, #tpu.memory_space<vmem>>, vector<8x32xf32>,
    %c0_54 = arith.constant 0 : index
    %c0_55 = arith.constant 0 : index
    %100 = vector.load %arg23[%c0_54, %c0_55] : memref<8x128xf32, #tpu.memory_space<vmem>>, vector<8x128xf32>
    %101 = arith.truncf %100 : vector<8x128xf32> to vector<8x128xbf16>
    %c0_56 = arith.constant 0 : index
    %c0_57 = arith.constant 0 : index
    %c0_58 = arith.constant 0 : index
    %102 = vector.load %arg8[%c0_56, %c0_57, %c0_58] : memref<1x128x128xbf16, #tpu.memory_space<vmem>>, vector<1x128x128xbf16>
    %103 = vector.shape_cast %102 : vector<1x128x128xbf16> to vector<128x128xbf16>
    %cst_59 = arith.constant dense<0.000000e+00> : vector<8x128xf32>
    %104 = tpu.matmul %101, %103, %cst_59 {dimension_numbers = #tpu.dot_dimension_numbers<[1], [0], [0], [1], [0, 0, 1, 1], [], []>} : vector<8x128xbf16>, vector<128x128xbf16>, vector<8x128xf32> -> vector<8x128xf32>
    %c0_60 = arith.constant 0 : index
    %c0_61 = arith.constant 0 : index
    %c0_62 = arith.constant 0 : index
    %105 = vector.load %arg9[%c0_60, %c0_61, %c0_62] : memref<1x1x128xf32, #tpu.memory_space<vmem>>, vector<1x1x128xf32>
    %106 = vector.shape_cast %105 : vector<1x1x128xf32> to vector<1x128xf32>
    %107 = vector.broadcast %106 : vector<1x128xf32> to vector<8x128xf32>
    %108 = arith.addf %104, %107 : vector<8x128xf32>
    %109 = arith.addf %108, %3 : vector<8x128xf32>
    %c0_63 = arith.constant 0 : index
    %c0_64 = arith.constant 0 : index
    %c0_65 = arith.constant 0 : index
    %110 = vector.load %arg10[%c0_63, %c0_64, %c0_65] : memref<1x1x128xf32, #tpu.memory_space<vmem>>, vector<1x1x128xf32>
    %111 = vector.shape_cast %110 : vector<1x1x128xf32> to vector<1x128xf32>
    %c0_66 = arith.constant 0 : index
    %c0_67 = arith.constant 0 : index
    %c0_68 = arith.constant 0 : index
    %112 = vector.load %arg11[%c0_66, %c0_67, %c0_68] : memref<1x1x128xf32, #tpu.memory_space<vmem>>, vector<1x1x128xf32>
    %113 = vector.shape_cast %112 : vector<1x1x128xf32> to vector<1x128xf32>
    %cst_69 = arith.constant dense<0.000000e+00> : vector<8xf32>
    %114 = vector.multi_reduction <add>, %109, %cst_69 [1] : vector<8x128xf32> to vector<8xf32>
    %115 = vector.shape_cast %114 : vector<8xf32> to vector<8x1xf32>
    %cst_70 = arith.constant 1.280000e+02 : f32
    %116 = vector.broadcast %cst_70 : f32 to vector<8x1xf32>
    %117 = arith.divf %115, %116 : vector<8x1xf32>
    %118 = vector.broadcast %117 : vector<8x1xf32> to vector<8x128xf32>
    %119 = arith.subf %109, %118 : vector<8x128xf32>
    %120 = arith.mulf %119, %119 : vector<8x128xf32>
    %cst_71 = arith.constant dense<0.000000e+00> : vector<8xf32>
    %121 = vector.multi_reduction <add>, %120, %cst_71 [1] : vector<8x128xf32> to vector<8xf32>
    %122 = vector.shape_cast %121 : vector<8xf32> to vector<8x1xf32>
    %cst_72 = arith.constant 1.280000e+02 : f32
    %123 = vector.broadcast %cst_72 : f32 to vector<8x1xf32>
    %124 = arith.divf %122, %123 : vector<8x1xf32>
    %125 = vector.broadcast %117 : vector<8x1xf32> to vector<8x128xf32>
    %126 = arith.subf %109, %125 : vector<8x128xf32>
    %cst_73 = arith.constant 9.99999996E-13 : f32
    %127 = vector.broadcast %cst_73 : f32 to vector<8x1xf32>
    %128 = arith.addf %124, %127 : vector<8x1xf32>
    %129 = math.rsqrt %128 : vector<8x1xf32>
    %130 = vector.broadcast %129 : vector<8x1xf32> to vector<8x128xf32>
    %131 = arith.mulf %126, %130 : vector<8x128xf32>
    %132 = vector.broadcast %111 : vector<1x128xf32> to vector<8x128xf32>
    %133 = arith.mulf %131, %132 : vector<8x128xf32>
    %134 = vector.broadcast %113 : vector<1x128xf32> to vector<8x128xf32>
    %135 = arith.addf %133, %134 : vector<8x128xf32>
    %136 = arith.truncf %135 : vector<8x128xf32> to vector<8x128xbf16>
    %c0_74 = arith.constant 0 : index
    %c0_75 = arith.constant 0 : index
    %c0_76 = arith.constant 0 : index
    %137 = vector.load %arg12[%c0_74, %c0_75, %c0_76] : memref<1x128x256xbf16, #tpu.memory_space<vmem>>, vector<1x128x256xbf16>
    %138 = vector.shape_cast %137 : vector<1x128x256xbf16> to vector<128x256xbf16>
    %cst_77 = arith.constant dense<0.000000e+00> : vector<8x256xf32>
    %139 = tpu.matmul %136, %138, %cst_77 {dimension_numbers = #tpu.dot_dimension_numbers<[1], [0], [0], [1], [0, 0, 1, 1], [], []>} : vector<8x128xbf16>, vector<128x256xbf16>, vector<8x256xf32> -> vector<8x256xf32>
    %c0_78 = arith.constant 0 : index
    %c0_79 = arith.constant 0 : index
    %c0_80 = arith.constant 0 : index
    %140 = vector.load %arg13[%c0_78, %c0_79, %c0_80] : memref<1x1x256xf32, #tpu.memory_space<vmem>>, vector<1x1x256xf32>
    %141 = vector.shape_cast %140 : vector<1x1x256xf32> to vector<1x256xf32>
    %142 = vector.broadcast %141 : vector<1x256xf32> to vector<8x256xf32>
    %143 = arith.addf %139, %142 : vector<8x256xf32>
    %144 = arith.mulf %143, %143 : vector<8x256xf32>
    %145 = arith.mulf %143, %144 : vector<8x256xf32>
    %cst_81 = arith.constant 4.471500e-02 : f32
    %146 = vector.broadcast %cst_81 : f32 to vector<8x256xf32>
    %147 = arith.mulf %146, %145 : vector<8x256xf32>
    %148 = arith.addf %143, %147 : vector<8x256xf32>
    %cst_82 = arith.constant 0.797884583 : f32
    %149 = vector.broadcast %cst_82 : f32 to vector<8x256xf32>
    %150 = arith.mulf %149, %148 : vector<8x256xf32>
    %151 = math.tanh %150 : vector<8x256xf32>
    %cst_83 = arith.constant 1.000000e+00 : f32
    %152 = vector.broadcast %cst_83 : f32 to vector<8x256xf32>
    %153 = arith.addf %152, %151 : vector<8x256xf32>
    %cst_84 = arith.constant 5.000000e-01 : f32
    %154 = vector.broadcast %cst_84 : f32 to vector<8x256xf32>
    %155 = arith.mulf %154, %153 : vector<8x256xf32>
    %156 = arith.mulf %143, %155 : vector<8x256xf32>
    %157 = arith.truncf %156 : vector<8x256xf32> to vector<8x256xbf16>
    %c0_85 = arith.constant 0 : index
    %c0_86 = arith.constant 0 : index
    %c0_87 = arith.constant 0 : index
    %158 = vector.load %arg14[%c0_85, %c0_86, %c0_87] : memref<1x256x128xbf16, #tpu.memory_space<vmem>>, vector<1x256x128xbf16>
    %159 = vector.shape_cast %158 : vector<1x256x128xbf16> to vector<256x128xbf16>
    %cst_88 = arith.constant dense<0.000000e+00> : vector<8x128xf32>
    %160 = tpu.matmul %157, %159, %cst_88 {dimension_numbers = #tpu.dot_dimension_numbers<[1], [0], [0], [1], [0, 0, 1, 1], [], []>} : vector<8x256xbf16>, vector<256x128xbf16>, vector<8x128xf32> -> vector<8x128xf32>
    %c0_89 = arith.constant 0 : index
    %c0_90 = arith.constant 0 : index
    %c0_91 = arith.constant 0 : index
    %161 = vector.load %arg15[%c0_89, %c0_90, %c0_91] : memref<1x1x128xf32, #tpu.memory_space<vmem>>, vector<1x1x128xf32>
    %162 = vector.shape_cast %161 : vector<1x1x128xf32> to vector<1x128xf32>
    %163 = vector.broadcast %162 : vector<1x128xf32> to vector<8x128xf32>
    %164 = arith.addf %160, %163 : vector<8x128xf32>
    %165 = arith.addf %164, %135 : vector<8x128xf32>
    %c0_92 = arith.constant 0 : index
    %c0_93 = arith.constant 0 : index
    %c0_94 = arith.constant 0 : index
    %166 = vector.load %arg16[%c0_92, %c0_93, %c0_94] : memref<1x1x128xf32, #tpu.memory_space<vmem>>, vector<1x1x128xf32>
    %167 = vector.shape_cast %166 : vector<1x1x128xf32> to vector<1x128xf32>
    %c0_95 = arith.constant 0 : index
    %c0_96 = arith.constant 0 : index
    %c0_97 = arith.constant 0 : index
    %168 = vector.load %arg17[%c0_95, %c0_96, %c0_97] : memref<1x1x128xf32, #tpu.memory_space<vmem>>, vector<1x1x128xf32>
    %169 = vector.shape_cast %168 : vector<1x1x128xf32> to vector<1x128xf32>
    %cst_98 = arith.constant dense<0.000000e+00> : vector<8xf32>
    %170 = vector.multi_reduction <add>, %165, %cst_98 [1] : vector<8x128xf32> to vector<8xf32>
    %171 = vector.shape_cast %170 : vector<8xf32> to vector<8x1xf32>
    %cst_99 = arith.constant 1.280000e+02 : f32
    %172 = vector.broadcast %cst_99 : f32 to vector<8x1xf32>
    %173 = arith.divf %171, %172 : vector<8x1xf32>
    %174 = vector.broadcast %173 : vector<8x1xf32> to vector<8x128xf32>
    %175 = arith.subf %165, %174 : vector<8x128xf32>
    %176 = arith.mulf %175, %175 : vector<8x128xf32>
    %cst_100 = arith.constant dense<0.000000e+00> : vector<8xf32>
    %177 = vector.multi_reduction <add>, %176, %cst_100 [1] : vector<8x128xf32> to vector<8xf32>
    %178 = vector.shape_cast %177 : vector<8xf32> to vector<8x1xf32>
    %cst_101 = arith.constant 1.280000e+02 : f32
    %179 = vector.broadcast %cst_101 : f32 to vector<8x1xf32>
    %180 = arith.divf %178, %179 : vector<8x1xf32>
    %181 = vector.broadcast %173 : vector<8x1xf32> to vector<8x128xf32>
    %182 = arith.subf %165, %181 : vector<8x128xf32>
    %cst_102 = arith.constant 9.99999996E-13 : f32
    %183 = vector.broadcast %cst_102 : f32 to vector<8x1xf32>
    %184 = arith.addf %180, %183 : vector<8x1xf32>
    %185 = math.rsqrt %184 : vector<8x1xf32>
    %186 = vector.broadcast %185 : vector<8x1xf32> to vector<8x128xf32>
    %187 = arith.mulf %182, %186 : vector<8x128xf32>
    %188 = vector.broadcast %167 : vector<1x128xf32> to vector<8x128xf32>
    %189 = arith.mulf %187, %188 : vector<8x128xf32>
    %190 = vector.broadcast %169 : vector<1x128xf32> to vector<8x128xf32>
    %191 = arith.addf %189, %190 : vector<8x128xf32>
    %c0_103 = arith.constant 0 : index
    %c0_104 = arith.constant 0 : index
    %192 = vector.load %arg21[%c0_103, %c0_104] : memref<8x128xf32, #tpu.memory_space<vmem>>, vector<8x128xf32>
    tpu.vector_store %arg21[%c0_103, %c0_104], %191 {strides = array<i32>} : memref<8x128xf32, #tpu.memory_space<vmem>>, vector<8x128xf32>,
    %c1_i32 = arith.constant 1 : i32
    %193 = arith.cmpi eq, %arg1, %c1_i32 : i32
    %194 = arith.extui %193 : i1 to i32
    %c0_i32_105 = arith.constant 0 : i32
    %195 = arith.cmpi ne, %194, %c0_i32_105 : i32
    scf.if %195 {
      %196 = vector.extract_strided_slice %191 {offsets = [0, 0], sizes = [1, 128], strides = [1, 1]} : vector<8x128xf32> to vector<1x128xf32>
      %197 = arith.truncf %196 : vector<1x128xf32> to vector<1x128xbf16>
      %c0_106 = arith.constant 0 : index
      %c0_107 = arith.constant 0 : index
      %198 = vector.load %arg18[%c0_106, %c0_107] : memref<128x128xbf16, #tpu.memory_space<vmem>>, vector<128x128xbf16>
      %cst_108 = arith.constant dense<0.000000e+00> : vector<1x128xf32>
      %199 = tpu.matmul %197, %198, %cst_108 {dimension_numbers = #tpu.dot_dimension_numbers<[1], [0], [0], [1], [0, 0, 1, 1], [], []>} : vector<1x128xbf16>, vector<128x128xbf16>, vector<1x128xf32> -> vector<1x128xf32>
      %c0_109 = arith.constant 0 : index
      %c0_110 = arith.constant 0 : index
      %200 = vector.load %arg19[%c0_109, %c0_110] : memref<1x128xf32, #tpu.memory_space<vmem>>, vector<1x128xf32>
      %201 = arith.addf %199, %200 : vector<1x128xf32>
      %202 = vector.shape_cast %201 : vector<1x128xf32> to vector<1x1x128xf32>
      %c0_111 = arith.constant 0 : index
      %c0_112 = arith.constant 0 : index
      %c0_113 = arith.constant 0 : index
      %203 = vector.load %arg20[%c0_111, %c0_112, %c0_113] : memref<1x1x128xf32, #tpu.memory_space<vmem>>, vector<1x1x128xf32>
      tpu.vector_store %arg20[%c0_111, %c0_112, %c0_113], %202 {strides = array<i32>} : memref<1x1x128xf32, #tpu.memory_space<vmem>>, vector<1x1x128xf32>,
    } else {
    }
    return
  }
  func.func @transform_0(%arg0: i32, %arg1: i32) -> (i32, i32, i32) {
    %c0_i32 = arith.constant 0 : i32
    %c0_i32_0 = arith.constant 0 : i32
    %c0_i32_1 = arith.constant 0 : i32
    return %arg0, %c0_i32, %c0_i32_0 : i32, i32, i32
  }
  func.func @transform_1(%arg0: i32, %arg1: i32) -> (i32, i32, i32) {
    %c0_i32 = arith.constant 0 : i32
    %c0_i32_0 = arith.constant 0 : i32
    %c0_i32_1 = arith.constant 0 : i32
    return %arg0, %c0_i32, %c0_i32_0 : i32, i32, i32
  }
  func.func @transform_2(%arg0: i32, %arg1: i32) -> (i32, i32) {
    %c0_i32 = arith.constant 0 : i32
    %c0_i32_0 = arith.constant 0 : i32
    %c0_i32_1 = arith.constant 0 : i32
    return %c0_i32, %c0_i32_0 : i32, i32
  }
  func.func @transform_3(%arg0: i32, %arg1: i32) -> (i32, i32) {
    %c0_i32 = arith.constant 0 : i32
    %c0_i32_0 = arith.constant 0 : i32
    %c0_i32_1 = arith.constant 0 : i32
    return %c0_i32, %c0_i32_0 : i32, i32
  }
  func.func @transform_4(%arg0: i32, %arg1: i32) -> (i32, i32, i32) {
    %c0_i32 = arith.constant 0 : i32
    %c0_i32_0 = arith.constant 0 : i32
    %c0_i32_1 = arith.constant 0 : i32
    return %arg1, %c0_i32, %c0_i32_0 : i32, i32, i32
  }
  func.func @transform_5(%arg0: i32, %arg1: i32) -> (i32, i32, i32) {
    %c0_i32 = arith.constant 0 : i32
    %c0_i32_0 = arith.constant 0 : i32
    %c0_i32_1 = arith.constant 0 : i32
    return %arg1, %c0_i32, %c0_i32_0 : i32, i32, i32
  }
  func.func @transform_6(%arg0: i32, %arg1: i32) -> (i32, i32, i32) {
    %c0_i32 = arith.constant 0 : i32
    %c0_i32_0 = arith.constant 0 : i32
    %c0_i32_1 = arith.constant 0 : i32
    return %arg1, %c0_i32, %c0_i32_0 : i32, i32, i32
  }
  func.func @transform_7(%arg0: i32, %arg1: i32) -> (i32, i32, i32) {
    %c0_i32 = arith.constant 0 : i32
    %c0_i32_0 = arith.constant 0 : i32
    %c0_i32_1 = arith.constant 0 : i32
    return %arg1, %c0_i32, %c0_i32_0 : i32, i32, i32
  }
  func.func @transform_8(%arg0: i32, %arg1: i32) -> (i32, i32, i32) {
    %c0_i32 = arith.constant 0 : i32
    %c0_i32_0 = arith.constant 0 : i32
    %c0_i32_1 = arith.constant 0 : i32
    return %arg1, %c0_i32, %c0_i32_0 : i32, i32, i32
  }
  func.func @transform_9(%arg0: i32, %arg1: i32) -> (i32, i32, i32) {
    %c0_i32 = arith.constant 0 : i32
    %c0_i32_0 = arith.constant 0 : i32
    %c0_i32_1 = arith.constant 0 : i32
    return %arg1, %c0_i32, %c0_i32_0 : i32, i32, i32
  }
  func.func @transform_10(%arg0: i32, %arg1: i32) -> (i32, i32, i32) {
    %c0_i32 = arith.constant 0 : i32
    %c0_i32_0 = arith.constant 0 : i32
    %c0_i32_1 = arith.constant 0 : i32
    return %arg1, %c0_i32, %c0_i32_0 : i32, i32, i32
  }
  func.func @transform_11(%arg0: i32, %arg1: i32) -> (i32, i32, i32) {
    %c0_i32 = arith.constant 0 : i32
    %c0_i32_0 = arith.constant 0 : i32
    %c0_i32_1 = arith.constant 0 : i32
    return %arg1, %c0_i32, %c0_i32_0 : i32, i32, i32
  }
  func.func @transform_12(%arg0: i32, %arg1: i32) -> (i32, i32, i32) {
    %c0_i32 = arith.constant 0 : i32
    %c0_i32_0 = arith.constant 0 : i32
    %c0_i32_1 = arith.constant 0 : i32
    return %arg1, %c0_i32, %c0_i32_0 : i32, i32, i32
  }
  func.func @transform_13(%arg0: i32, %arg1: i32) -> (i32, i32, i32) {
    %c0_i32 = arith.constant 0 : i32
    %c0_i32_0 = arith.constant 0 : i32
    %c0_i32_1 = arith.constant 0 : i32
    return %arg1, %c0_i32, %c0_i32_0 : i32, i32, i32
  }
  func.func @transform_14(%arg0: i32, %arg1: i32) -> (i32, i32, i32) {
    %c0_i32 = arith.constant 0 : i32
    %c0_i32_0 = arith.constant 0 : i32
    %c0_i32_1 = arith.constant 0 : i32
    return %arg1, %c0_i32, %c0_i32_0 : i32, i32, i32
  }
  func.func @transform_15(%arg0: i32, %arg1: i32) -> (i32, i32, i32) {
    %c0_i32 = arith.constant 0 : i32
    %c0_i32_0 = arith.constant 0 : i32
    %c0_i32_1 = arith.constant 0 : i32
    return %arg1, %c0_i32, %c0_i32_0 : i32, i32, i32
  }
  func.func @transform_16(%arg0: i32, %arg1: i32) -> (i32, i32) {
    %c0_i32 = arith.constant 0 : i32
    %c0_i32_0 = arith.constant 0 : i32
    %c0_i32_1 = arith.constant 0 : i32
    return %c0_i32, %c0_i32_0 : i32, i32
  }
  func.func @transform_17(%arg0: i32, %arg1: i32) -> (i32, i32) {
    %c0_i32 = arith.constant 0 : i32
    %c0_i32_0 = arith.constant 0 : i32
    %c0_i32_1 = arith.constant 0 : i32
    return %c0_i32, %c0_i32_0 : i32, i32
  }
  func.func @transform_18(%arg0: i32, %arg1: i32) -> (i32, i32, i32) {
    %c0_i32 = arith.constant 0 : i32
    %c0_i32_0 = arith.constant 0 : i32
    %c0_i32_1 = arith.constant 0 : i32
    return %arg0, %c0_i32, %c0_i32_0 : i32, i32, i32
  }
}

</mosaic_0001>

<llo_original>
// kernel: base_codex_clip_forward.2
$region0: #{base_codex_clip_forward.2}
  #allocation0 [shape = 'u32[]', space=smem, size = 0x4, offset = 0x4, fixed_abs, tag = 'smem constant byte address 0x4 - core index']
  #allocation1 [shape = 'u32[72,128]{1,0:T(1,128)}', space=vmem, size = 0x9000, scoped, tag = 'internal scratch']
  %s0 = inlined_call_operand.vmem [shape: bf16[2,128], index: 0, kind: input, shape index: {}]
  %s1 = inlined_call_operand.hbm [shape: bf16[128,128], index: 1, kind: input, shape index: {}]
  %s2 = inlined_call_operand.vmem [shape: f32[1,128], index: 2, kind: input, shape index: {}]
  %s3 = inlined_call_operand.hbm [shape: f32[2,128], index: 3, kind: output, shape index: {}]
  %s4 = sld [smem:[#allocation0]]
  $region26: #{base_codex_clip_forward.2} parent=0
    _
  %s6 = ssub.s32 1, %s4
  %s7 = scalar_select 0, %s6, %s4
  $region1: #{base_codex_clip_forward.2} parent=0
    #allocation2 [shape = 'u8[32768]{0}', space=vmem, size = 0x8000, scoped, tag = 'input window, operand 1, single buffered']
    #allocation3 [shape = 's32[1]{0}', space=sflag, size = 0x4, scoped, tag = 'scoped memory for base_codex_clip_forward.2']
    #allocation4 [shape = 's32[1]{0}', space=sflag, size = 0x4, scoped, tag = 'scoped memory for base_codex_clip_forward.2']
    #allocation5 [shape = 'u8[1024]{0}', space=vmem, size = 0x400, scoped, tag = 'output window, operand 0, single buffered']
    %8 = vsyncpa [#allocation3], 0
    %9 = vsyncpa [#allocation4], 0
    // Predicated region
    $region2: #{base_codex_clip_forward.2} parent=1 // pred_check
      _
    $region3: #{base_codex_clip_forward.2} parent=1 // pred_check_branch
      %11 = sbr.rel (0) target = $region5
    $region4: #{base_codex_clip_forward.2} parent=1 // pred_region
      _
    $region5: #{base_codex_clip_forward.2} parent=1 // pred_fallthru
      _
    // Predicated region
    $region6: #{base_codex_clip_forward.2} parent=1 // pred_check
      _
    $region7: #{base_codex_clip_forward.2} parent=1 // pred_check_branch
      %13 = sbr.rel (0) target = $region9
    $region8: #{base_codex_clip_forward.2} parent=1 // pred_region
      %15 = vsyncadd [#allocation3], 0
      %s16 = sshll.u32 %s1, 4
      %s17 = int_to_ptr.hbm [resolvable:$true] %s16
      %s18 = sshll.u32 [#allocation2], 4
      %s19 = int_to_ptr.vmem [resolvable:$true] %s18
      %24 = dma.hbm_to_vmem [thread:$0]  %s17, 1024, %s19, [#allocation3], 64, 64, 4
    $region9: #{base_codex_clip_forward.2} parent=1 // pred_fallthru
      _
    // Predicated region
    $region10: #{base_codex_clip_forward.2} parent=1 // pred_check
      _
    $region11: #{base_codex_clip_forward.2} parent=1 // pred_check_branch
      %26 = sbr.rel (0) target = $region13
    $region12: #{base_codex_clip_forward.2} parent=1 // pred_region
      _
    $region13: #{base_codex_clip_forward.2} parent=1 // pred_fallthru
      _
    // Predicated region
    $region14: #{base_codex_clip_forward.2} parent=1 // pred_check
      _
    $region15: #{base_codex_clip_forward.2} parent=1 // pred_check_branch
      %28 = sbr.rel (0) target = $region17
    $region16: #{base_codex_clip_forward.2} parent=1 // pred_region
      %30 = dma.done [#allocation3], 1024
    $region17: #{base_codex_clip_forward.2} parent=1 // pred_fallthru
      _
    %v31 = vld [vmem:[%s0] sm:$0x1]
    %v32 = vld [vmem:[#allocation2] sm:$0xf]
    %v33 = vld [vmem:[#allocation2 + $0x4] sm:$0xf]
    %v34 = vld [vmem:[#allocation2 + $0x8] sm:$0xf]
    %v35 = vld [vmem:[#allocation2 + $0xc] sm:$0xf]
    %v36 = vld [vmem:[#allocation2 + $0x10] sm:$0xf]
    %v37 = vld [vmem:[#allocation2 + $0x14] sm:$0xf]
    %v38 = vld [vmem:[#allocation2 + $0x18] sm:$0xf]
    %v39 = vld [vmem:[#allocation2 + $0x1c] sm:$0xf]
    %v40 = vld [vmem:[#allocation2 + $0x20] sm:$0xf]
    %v41 = vld [vmem:[#allocation2 + $0x24] sm:$0xf]
    %v42 = vld [vmem:[#allocation2 + $0x28] sm:$0xf]
    %v43 = vld [vmem:[#allocation2 + $0x2c] sm:$0xf]
    %v44 = vld [vmem:[#allocation2 + $0x30] sm:$0xf]
    %v45 = vld [vmem:[#allocation2 + $0x34] sm:$0xf]
    %v46 = vld [vmem:[#allocation2 + $0x38] sm:$0xf]
    %v47 = vld [vmem:[#allocation2 + $0x3c] sm:$0xf]
    %v48 = vld [vmem:[%s2] sm:$0x1]
    %v50 = vperm.slane %v48, 0
    %v68 = vunpack.c.l.b16 %v32
    %v69 = vunpack.c.l.b16 %v33
    %v70 = vunpack.c.l.b16 %v34
    %v71 = vunpack.c.l.b16 %v35
    %v72 = vunpack.c.l.b16 %v36
    %v73 = vunpack.c.l.b16 %v37
    %v74 = vunpack.c.l.b16 %v38
    %v75 = vunpack.c.l.b16 %v39
    %v76 = vunpack.c.l.b16 %v40
    %v77 = vunpack.c.l.b16 %v41
    %v78 = vunpack.c.l.b16 %v42
    %v79 = vunpack.c.l.b16 %v43
    %v80 = vunpack.c.l.b16 %v44
    %v81 = vunpack.c.l.b16 %v45
    %v82 = vunpack.c.l.b16 %v46
    %v83 = vunpack.c.l.b16 %v47
    %v84 = vpack.c.b16 %v69, %v68
    %v85 = vpack.c.b16 %v71, %v70
    %v86 = vpack.c.b16 %v73, %v72
    %v87 = vpack.c.b16 %v75, %v74
    %v88 = vpack.c.b16 %v77, %v76
    %v89 = vpack.c.b16 %v79, %v78
    %v90 = vpack.c.b16 %v81, %v80
    %v91 = vpack.c.b16 %v83, %v82
    %100 = vmatpush.bf16.msra.mxu0 %v91
    %101 = vmatpush.bf16.msra.mxu0 %v90
    %102 = vmatpush.bf16.msra.mxu0 %v89
    %103 = vmatpush.bf16.msra.mxu0 %v88
    %104 = vmatpush.bf16.msra.mxu0 %v87
    %105 = vmatpush.bf16.msra.mxu0 %v86
    %106 = vmatpush.bf16.msra.mxu0 %v85
    %107 = vmatpush.bf16.msra.mxu0 %v84
    %108 = vmatmul.bf16.gmra.mxu0 %v31
    %v109 = vpop.f32.mrf.mxu0
    %v110 = vadd.f32 %v50, %v109
    %v111 = vpop.f32.mrf.mxu0
    %112 = vdwg.mxu0
    %113 = vst [vmem:[#allocation5] sm:$0x3] %v110
    // Predicated region
    $region18: #{base_codex_clip_forward.2} parent=1 // pred_check
      _
    $region19: #{base_codex_clip_forward.2} parent=1 // pred_check_branch
      %115 = sbr.rel (0) target = $region21
    $region20: #{base_codex_clip_forward.2} parent=1 // pred_region
      %117 = vsyncadd [#allocation4], 0
      %s119 = sshll.u32 [#allocation5], 4
      %s120 = int_to_ptr.vmem [resolvable:$true] %s119
      %s121 = sshll.u32 %s3, 4
      %s122 = int_to_ptr.hbm [resolvable:$true] %s121
      %124 = dma.vmem_to_hbm [thread:$0]  %s120, 32, %s122, [#allocation4]
    $region21: #{base_codex_clip_forward.2} parent=1 // pred_fallthru
      _
    // Predicated region
    $region22: #{base_codex_clip_forward.2} parent=1 // pred_check
      _
    $region23: #{base_codex_clip_forward.2} parent=1 // pred_check_branch
      %126 = sbr.rel (0) target = $region25
    $region24: #{base_codex_clip_forward.2} parent=1 // pred_region
      %128 = dma.done [#allocation4], 32
    $region25: #{base_codex_clip_forward.2} parent=1 // pred_fallthru
      _
    %129 = vsyncpa [#allocation3], 1
    %130 = vsyncpa [#allocation4], 1

// kernel: base_codex_clip_forward.3
$region0: #{base_codex_clip_forward.3}
  #allocation0 [shape = 'u32[]', space=smem, size = 0x4, offset = 0x4, fixed_abs, tag = 'smem constant byte address 0x4 - core index']
  #allocation1 [shape = 'u32[72,128]{1,0:T(1,128)}', space=vmem, size = 0x9000, scoped, tag = 'internal scratch']
  #allocation2 [shape = 'f32[8,128]{1,0:T(8,128)}', space=vmem, size = 0x1000, scoped, tag = 'scratch operand']
  #allocation3 [shape = 'bf16[8,384]{1,0:T(8,128)(2,1)}', space=vmem, size = 0x1800, scoped, tag = 'scratch operand']
  #allocation4 [shape = 'f32[8,128]{1,0:T(8,128)}', space=vmem, size = 0x1000, scoped, tag = 'scratch operand']
  %s0 = inlined_call_operand.vmem [shape: f32[2,1,8], index: 0, kind: input, shape index: {}]
  %s1 = inlined_call_operand.vmem [shape: f32[2,8,128], index: 1, kind: input, shape index: {}]
  %s2 = inlined_call_operand.vmem [shape: f32[1,128], index: 2, kind: input, shape index: {}]
  %s3 = inlined_call_operand.vmem [shape: f32[1,128], index: 3, kind: input, shape index: {}]
  %s4 = inlined_call_operand.hbm [shape: bf16[2,128,384], index: 4, kind: input, shape index: {}]
  %s5 = inlined_call_operand.vmem [shape: f32[2,1,384], index: 5, kind: input, shape index: {}]
  %s6 = inlined_call_operand.vmem [shape: bf16[2,128,128], index: 6, kind: input, shape index: {}]
  %s7 = inlined_call_operand.vmem [shape: f32[2,1,128], index: 7, kind: input, shape index: {}]
  %s8 = inlined_call_operand.vmem [shape: f32[2,1,128], index: 8, kind: input, shape index: {}]
  %s9 = inlined_call_operand.vmem [shape: f32[2,1,128], index: 9, kind: input, shape index: {}]
  %s10 = inlined_call_operand.hbm [shape: bf16[2,128,256], index: 10, kind: input, shape index: {}]
  %s11 = inlined_call_operand.vmem [shape: f32[2,1,256], index: 11, kind: input, shape index: {}]
  %s12 = inlined_call_operand.hbm [shape: bf16[2,256,128], index: 12, kind: input, shape index: {}]
  %s13 = inlined_call_operand.vmem [shape: f32[2,1,128], index: 13, kind: input, shape index: {}]
  %s14 = inlined_call_operand.vmem [shape: f32[2,1,128], index: 14, kind: input, shape index: {}]
  %s15 = inlined_call_operand.vmem [shape: f32[2,1,128], index: 15, kind: input, shape index: {}]
  %s16 = inlined_call_operand.hbm [shape: bf16[128,128], index: 16, kind: input, shape index: {}]
  %s17 = inlined_call_operand.vmem [shape: f32[1,128], index: 17, kind: input, shape index: {}]
  %s18 = inlined_call_operand.hbm [shape: f32[2,1,128], index: 18, kind: output, shape index: {}]
  %s19 = sld [smem:[#allocation0]]
  $region129: #{base_codex_clip_forward.3} parent=0
    _
  %s21 = ssub.s32 1, %s19
  %s22 = scalar_select 0, %s21, %s19
  $region1: #{base_codex_clip_forward.3} parent=0
    #allocation5 [shape = 'u8[196608]{0}', space=vmem, size = 0x30000, scoped, tag = 'input window, operand 4']
    #allocation6 [shape = 's32[2]{0}', space=sflag, size = 0x8, scoped, tag = 'scoped memory for base_codex_clip_forward.3']
    #allocation7 [shape = 's32[2]{0}', space=sflag, size = 0x8, scoped, tag = 'scoped memory for base_codex_clip_forward.3']
    #allocation8 [shape = 'u8[131072]{0}', space=vmem, size = 0x20000, scoped, tag = 'input window, operand 10']
    #allocation9 [shape = 's32[2]{0}', space=sflag, size = 0x8, scoped, tag = 'scoped memory for base_codex_clip_forward.3']
    #allocation10 [shape = 'u8[131072]{0}', space=vmem, size = 0x20000, scoped, tag = 'input window, operand 12']
    #allocation11 [shape = 'u8[32768]{0}', space=vmem, size = 0x8000, scoped, tag = 'input window, operand 16, single buffered']
    #allocation12 [shape = 's32[1]{0}', space=sflag, size = 0x4, scoped, tag = 'scoped memory for base_codex_clip_forward.3']
    #allocation13 [shape = 'u8[1024]{0}', space=vmem, size = 0x400, scoped, tag = 'output window, operand 0']
    %23 = vsyncpa [#allocation6], 0
    %s24 = scalar_lea.sflag [#allocation6], 1
    %25 = vsyncpa %s24, 0
    %26 = vsyncpa [#allocation9], 0
    %s27 = scalar_lea.sflag [#allocation9], 1
    %28 = vsyncpa %s27, 0
    %29 = vsyncpa [#allocation12], 0
    %30 = vsyncpa [#allocation7], 0
    %s31 = scalar_lea.sflag [#allocation7], 1
    %32 = vsyncpa %s31, 0
    loop: start=0, step=1, limit=6
    $region2: #{base_codex_clip_forward.3} parent=1 // loop_pre_header
      _
    $region3: #{base_codex_clip_forward.3} parent=1 // loop_header
      %s34 = sphi 0, %s38
      %p35 = scmp.ge.s32.totalorder %s34, 6
      %s41 = sphi 0, %s53
      %s42 = sphi 0, %s49
      %s43 = sphi 0, %s41
      %s44 = sphi 0, %s42
      %s45 = sphi 0, %s43
      %s46 = sphi 0, %s44
      %s56 = sphi 0, %s58
      %s59 = sphi 0, %s56
      %s60 = sphi 0, %s59
      %s76 = sphi 0, %s60
      %s82 = sphi 0, %s84
      %s85 = sphi 0, %s82
      %s86 = sphi 0, %s85
      %s102 = sphi 0, %s86
      %s106 = sphi 0, %s106
      %s108 = sphi 0, %s106
      %s109 = sphi 0, %s108
      %s123 = sphi 0, %s109
      %s127 = sphi 0, %s127
      %s129 = sphi 0, %s127
      %s130 = sphi 0, %s129
      %s144 = sphi 0, %s130
      %s150 = sphi 0, %s152
      %s153 = sphi 0, %s150
      %s154 = sphi 0, %s153
      %s170 = sphi 0, %s154
      %s176 = sphi 0, %s178
      %s179 = sphi 0, %s176
      %s180 = sphi 0, %s179
      %s196 = sphi 0, %s180
      %s202 = sphi 0, %s204
      %s205 = sphi 0, %s202
      %s206 = sphi 0, %s205
      %s222 = sphi 0, %s206
      %s228 = sphi 0, %s230
      %s231 = sphi 0, %s228
      %s232 = sphi 0, %s231
      %s248 = sphi 0, %s232
      %s254 = sphi 0, %s256
      %s257 = sphi 0, %s254
      %s258 = sphi 0, %s257
      %s274 = sphi 0, %s258
      %s280 = sphi 0, %s282
      %s283 = sphi 0, %s280
      %s284 = sphi 0, %s283
      %s300 = sphi 0, %s284
      %s306 = sphi 0, %s308
      %s309 = sphi 0, %s306
      %s310 = sphi 0, %s309
      %s326 = sphi 0, %s310
      %s332 = sphi 0, %s334
      %s335 = sphi 0, %s332
      %s336 = sphi 0, %s335
      %s352 = sphi 0, %s336
      %s358 = sphi 0, %s360
      %s361 = sphi 0, %s358
      %s362 = sphi 0, %s361
      %s378 = sphi 0, %s362
      %s384 = sphi 0, %s386
      %s387 = sphi 0, %s384
      %s388 = sphi 0, %s387
      %s404 = sphi 0, %s388
      %s410 = sphi 0, %s412
      %s413 = sphi 0, %s410
      %s414 = sphi 0, %s413
      %s430 = sphi 0, %s414
      %s436 = sphi 0, %s438
      %s439 = sphi 0, %s436
      %s440 = sphi 0, %s439
      %s456 = sphi 0, %s440
      %s460 = sphi 0, %s460
      %s462 = sphi 0, %s460
      %s463 = sphi 0, %s462
      %s477 = sphi 0, %s463
      %s481 = sphi 0, %s481
      %s483 = sphi 0, %s481
      %s484 = sphi 0, %s483
      %s498 = sphi 0, %s484
      %s504 = sphi 0, %s506
      %s507 = sphi 0, %s504
      %s508 = sphi 0, %s507
      %s524 = sphi 0, %s508
    $region4: #{base_codex_clip_forward.3} parent=1 // loop_header_branch
      %37 = sbr.rel (%p35) target = $region8
    $region5: #{base_codex_clip_forward.3} parent=1 // loop_body
      %s39 = ssub.s32 %s34, 1
      %s40 = ssub.s32 %s34, 2
      %s47 = sadd.s32 1, %s42
      %p48 = scmp.ge.s32.totalorder %s47, 2
      %s49 = scalar_select %p48, 0, %s47
      %s50 = sadd.s32 1, %s41
      %s51 = scalar_select %p48, %s50, %s41
      %p52 = scmp.ge.s32.totalorder %s51, 2
      %s53 = scalar_select %p52, 0, %s51
      %s54 = ssub.s32 %s41, %s53
      %p55 = scmp.eq.s32.totalorder %s54, 0
      %s57 = sadd.s32 %s56, 1
      %s58 = scalar_select %p55, %s56, %s57
      %p61 = pneg %p55
      %p62 = scmp.eq.s32.totalorder %s34, 3
      %p63 = por %p61, %p62
      %p64 = scmp.ne.s32.totalorder %s56, %s59
      %p65 = scmp.eq.s32.totalorder %s34, 0
      %p66 = por %p64, %p65
      %p67 = scmp.ne.s32.totalorder %s56, %s59
      %p68 = scmp.eq.s32.totalorder %s39, 3
      %p69 = por %p67, %p68
      %p70 = scmp.ne.s32.totalorder %s59, %s60
      %p71 = scmp.eq.s32.totalorder %s39, 0
      %p72 = por %p70, %p71
      %p73 = scmp.ne.s32.totalorder %s59, %s60
      %p74 = scmp.eq.s32.totalorder %s40, 3
      %p75 = por %p73, %p74
      %p77 = scmp.ne.s32.totalorder %s60, %s76
      %p78 = scmp.eq.s32.totalorder %s40, 0
      %p79 = por %p77, %p78
      %s80 = ssub.s32 %s41, %s53
      %p81 = scmp.eq.s32.totalorder %s80, 0
      %s83 = sadd.s32 %s82, 1
      %s84 = scalar_select %p81, %s82, %s83
      %p87 = pneg %p81
      %p88 = scmp.eq.s32.totalorder %s34, 3
      %p89 = por %p87, %p88
      %p90 = scmp.ne.s32.totalorder %s82, %s85
      %p91 = scmp.eq.s32.totalorder %s34, 0
      %p92 = por %p90, %p91
      %p93 = scmp.ne.s32.totalorder %s82, %s85
      %p94 = scmp.eq.s32.totalorder %s39, 3
      %p95 = por %p93, %p94
      %p96 = scmp.ne.s32.totalorder %s85, %s86
      %p97 = scmp.eq.s32.totalorder %s39, 0
      %p98 = por %p96, %p97
      %p99 = scmp.ne.s32.totalorder %s85, %s86
      %p100 = scmp.eq.s32.totalorder %s40, 3
      %p101 = por %p99, %p100
      %p103 = scmp.ne.s32.totalorder %s86, %s102
      %p104 = scmp.eq.s32.totalorder %s40, 0
      %p105 = por %p103, %p104
      %s107 = sadd.s32 %s106, 1
      %p110 = scmp.eq.s32.totalorder %s34, 3
      %p111 = scmp.ne.s32.totalorder %s106, %s108
      %p112 = scmp.eq.s32.totalorder %s34, 0
      %p113 = por %p111, %p112
      %p114 = scmp.ne.s32.totalorder %s106, %s108
      %p115 = scmp.eq.s32.totalorder %s39, 3
      %p116 = por %p114, %p115
      %p117 = scmp.ne.s32.totalorder %s108, %s109
      %p118 = scmp.eq.s32.totalorder %s39, 0
      %p119 = por %p117, %p118
      %p120 = scmp.ne.s32.totalorder %s108, %s109
      %p121 = scmp.eq.s32.totalorder %s40, 3
      %p122 = por %p120, %p121
      %p124 = scmp.ne.s32.totalorder %s109, %s123
      %p125 = scmp.eq.s32.totalorder %s40, 0
      %p126 = por %p124, %p125
      %s128 = sadd.s32 %s127, 1
      %p131 = scmp.eq.s32.totalorder %s34, 3
      %p132 = scmp.ne.s32.totalorder %s127, %s129
      %p133 = scmp.eq.s32.totalorder %s34, 0
      %p134 = por %p132, %p133
      %p135 = scmp.ne.s32.totalorder %s127, %s129
      %p136 = scmp.eq.s32.totalorder %s39, 3
      %p137 = por %p135, %p136
      %p138 = scmp.ne.s32.totalorder %s129, %s130
      %p139 = scmp.eq.s32.totalorder %s39, 0
      %p140 = por %p138, %p139
      %p141 = scmp.ne.s32.totalorder %s129, %s130
      %p142 = scmp.eq.s32.totalorder %s40, 3
      %p143 = por %p141, %p142
      %p145 = scmp.ne.s32.totalorder %s130, %s144
      %p146 = scmp.eq.s32.totalorder %s40, 0
      %p147 = por %p145, %p146
      %s148 = ssub.s32 %s42, %s49
      %p149 = scmp.eq.s32.totalorder %s148, 0
      %s151 = sadd.s32 %s150, 1
      %s152 = scalar_select %p149, %s150, %s151
      %p155 = pneg %p149
      %p156 = scmp.eq.s32.totalorder %s34, 3
      %p157 = por %p155, %p156
      %p158 = scmp.ne.s32.totalorder %s150, %s153
      %p159 = scmp.eq.s32.totalorder %s34, 0
      %p160 = por %p158, %p159
      %p161 = scmp.ne.s32.totalorder %s150, %s153
      %p162 = scmp.eq.s32.totalorder %s39, 3
      %p163 = por %p161, %p162
      %p164 = scmp.ne.s32.totalorder %s153, %s154
      %p165 = scmp.eq.s32.totalorder %s39, 0
      %p166 = por %p164, %p165
      %p167 = scmp.ne.s32.totalorder %s153, %s154
      %p168 = scmp.eq.s32.totalorder %s40, 3
      %p169 = por %p167, %p168
      %p171 = scmp.ne.s32.totalorder %s154, %s170
      %p172 = scmp.eq.s32.totalorder %s40, 0
      %p173 = por %p171, %p172
      %s174 = ssub.s32 %s42, %s49
      %p175 = scmp.eq.s32.totalorder %s174, 0
      %s177 = sadd.s32 %s176, 1
      %s178 = scalar_select %p175, %s176, %s177
      %p181 = pneg %p175
      %p182 = scmp.eq.s32.totalorder %s34, 3
      %p183 = por %p181, %p182
      %p184 = scmp.ne.s32.totalorder %s176, %s179
      %p185 = scmp.eq.s32.totalorder %s34, 0
      %p186 = por %p184, %p185
      %p187 = scmp.ne.s32.totalorder %s176, %s179
      %p188 = scmp.eq.s32.totalorder %s39, 3
      %p189 = por %p187, %p188
      %p190 = scmp.ne.s32.totalorder %s179, %s180
      %p191 = scmp.eq.s32.totalorder %s39, 0
      %p192 = por %p190, %p191
      %p193 = scmp.ne.s32.totalorder %s179, %s180
      %p194 = scmp.eq.s32.totalorder %s40, 3
      %p195 = por %p193, %p194
      %p197 = scmp.ne.s32.totalorder %s180, %s196
      %p198 = scmp.eq.s32.totalorder %s40, 0
      %p199 = por %p197, %p198
      %s200 = ssub.s32 %s42, %s49
      %p201 = scmp.eq.s32.totalorder %s200, 0
      %s203 = sadd.s32 %s202, 1
      %s204 = scalar_select %p201, %s202, %s203
      %p207 = pneg %p201
      %p208 = scmp.eq.s32.totalorder %s34, 3
      %p209 = por %p207, %p208
      %p210 = scmp.ne.s32.totalorder %s202, %s205
      %p211 = scmp.eq.s32.totalorder %s34, 0
      %p212 = por %p210, %p211
      %p213 = scmp.ne.s32.totalorder %s202, %s205
      %p214 = scmp.eq.s32.totalorder %s39, 3
      %p215 = por %p213, %p214
      %p216 = scmp.ne.s32.totalorder %s205, %s206
      %p217 = scmp.eq.s32.totalorder %s39, 0
      %p218 = por %p216, %p217
      %p219 = scmp.ne.s32.totalorder %s205, %s206
      %p220 = scmp.eq.s32.totalorder %s40, 3
      %p221 = por %p219, %p220
      %p223 = scmp.ne.s32.totalorder %s206, %s222
      %p224 = scmp.eq.s32.totalorder %s40, 0
      %p225 = por %p223, %p224
      %s226 = ssub.s32 %s42, %s49
      %p227 = scmp.eq.s32.totalorder %s226, 0
      %s229 = sadd.s32 %s228, 1
      %s230 = scalar_select %p227, %s228, %s229
      %p233 = pneg %p227
      %p234 = scmp.eq.s32.totalorder %s34, 3
      %p235 = por %p233, %p234
      %p236 = scmp.ne.s32.totalorder %s228, %s231
      %p237 = scmp.eq.s32.totalorder %s34, 0
      %p238 = por %p236, %p237
      %p239 = scmp.ne.s32.totalorder %s228, %s231
      %p240 = scmp.eq.s32.totalorder %s39, 3
      %p241 = por %p239, %p240
      %p242 = scmp.ne.s32.totalorder %s231, %s232
      %p243 = scmp.eq.s32.totalorder %s39, 0
      %p244 = por %p242, %p243
      %p245 = scmp.ne.s32.totalorder %s231, %s232
      %p246 = scmp.eq.s32.totalorder %s40, 3
      %p247 = por %p245, %p246
      %p249 = scmp.ne.s32.totalorder %s232, %s248
      %p250 = scmp.eq.s32.totalorder %s40, 0
      %p251 = por %p249, %p250
      %s252 = ssub.s32 %s42, %s49
      %p253 = scmp.eq.s32.totalorder %s252, 0
      %s255 = sadd.s32 %s254, 1
      %s256 = scalar_select %p253, %s254, %s255
      %p259 = pneg %p253
      %p260 = scmp.eq.s32.totalorder %s34, 3
      %p261 = por %p259, %p260
      %p262 = scmp.ne.s32.totalorder %s254, %s257
      %p263 = scmp.eq.s32.totalorder %s34, 0
      %p264 = por %p262, %p263
      %p265 = scmp.ne.s32.totalorder %s254, %s257
      %p266 = scmp.eq.s32.totalorder %s39, 3
      %p267 = por %p265, %p266
      %p268 = scmp.ne.s32.totalorder %s257, %s258
      %p269 = scmp.eq.s32.totalorder %s39, 0
      %p270 = por %p268, %p269
      %p271 = scmp.ne.s32.totalorder %s257, %s258
      %p272 = scmp.eq.s32.totalorder %s40, 3
      %p273 = por %p271, %p272
      %p275 = scmp.ne.s32.totalorder %s258, %s274
      %p276 = scmp.eq.s32.totalorder %s40, 0
      %p277 = por %p275, %p276
      %s278 = ssub.s32 %s42, %s49
      %p279 = scmp.eq.s32.totalorder %s278, 0
      %s281 = sadd.s32 %s280, 1
      %s282 = scalar_select %p279, %s280, %s281
      %p285 = pneg %p279
      %p286 = scmp.eq.s32.totalorder %s34, 3
      %p287 = por %p285, %p286
      %p288 = scmp.ne.s32.totalorder %s280, %s283
      %p289 = scmp.eq.s32.totalorder %s34, 0
      %p290 = por %p288, %p289
      %p291 = scmp.ne.s32.totalorder %s280, %s283
      %p292 = scmp.eq.s32.totalorder %s39, 3
      %p293 = por %p291, %p292
      %p294 = scmp.ne.s32.totalorder %s283, %s284
      %p295 = scmp.eq.s32.totalorder %s39, 0
      %p296 = por %p294, %p295
      %p297 = scmp.ne.s32.totalorder %s283, %s284
      %p298 = scmp.eq.s32.totalorder %s40, 3
      %p299 = por %p297, %p298
      %p301 = scmp.ne.s32.totalorder %s284, %s300
      %p302 = scmp.eq.s32.totalorder %s40, 0
      %p303 = por %p301, %p302
      %s304 = ssub.s32 %s42, %s49
      %p305 = scmp.eq.s32.totalorder %s304, 0
      %s307 = sadd.s32 %s306, 1
      %s308 = scalar_select %p305, %s306, %s307
      %p311 = pneg %p305
      %p312 = scmp.eq.s32.totalorder %s34, 3
      %p313 = por %p311, %p312
      %p314 = scmp.ne.s32.totalorder %s306, %s309
      %p315 = scmp.eq.s32.totalorder %s34, 0
      %p316 = por %p314, %p315
      %p317 = scmp.ne.s32.totalorder %s306, %s309
      %p318 = scmp.eq.s32.totalorder %s39, 3
      %p319 = por %p317, %p318
      %p320 = scmp.ne.s32.totalorder %s309, %s310
      %p321 = scmp.eq.s32.totalorder %s39, 0
      %p322 = por %p320, %p321
      %p323 = scmp.ne.s32.totalorder %s309, %s310
      %p324 = scmp.eq.s32.totalorder %s40, 3
      %p325 = por %p323, %p324
      %p327 = scmp.ne.s32.totalorder %s310, %s326
      %p328 = scmp.eq.s32.totalorder %s40, 0
      %p329 = por %p327, %p328
      %s330 = ssub.s32 %s42, %s49
      %p331 = scmp.eq.s32.totalorder %s330, 0
      %s333 = sadd.s32 %s332, 1
      %s334 = scalar_select %p331, %s332, %s333
      %p337 = pneg %p331
      %p338 = scmp.eq.s32.totalorder %s34, 3
      %p339 = por %p337, %p338
      %p340 = scmp.ne.s32.totalorder %s332, %s335
      %p341 = scmp.eq.s32.totalorder %s34, 0
      %p342 = por %p340, %p341
      %p343 = scmp.ne.s32.totalorder %s332, %s335
      %p344 = scmp.eq.s32.totalorder %s39, 3
      %p345 = por %p343, %p344
      %p346 = scmp.ne.s32.totalorder %s335, %s336
      %p347 = scmp.eq.s32.totalorder %s39, 0
      %p348 = por %p346, %p347
      %p349 = scmp.ne.s32.totalorder %s335, %s336
      %p350 = scmp.eq.s32.totalorder %s40, 3
      %p351 = por %p349, %p350
      %p353 = scmp.ne.s32.totalorder %s336, %s352
      %p354 = scmp.eq.s32.totalorder %s40, 0
      %p355 = por %p353, %p354
      %s356 = ssub.s32 %s42, %s49
      %p357 = scmp.eq.s32.totalorder %s356, 0
      %s359 = sadd.s32 %s358, 1
      %s360 = scalar_select %p357, %s358, %s359
      %p363 = pneg %p357
      %p364 = scmp.eq.s32.totalorder %s34, 3
      %p365 = por %p363, %p364
      %p366 = scmp.ne.s32.totalorder %s358, %s361
      %p367 = scmp.eq.s32.totalorder %s34, 0
      %p368 = por %p366, %p367
      %p369 = scmp.ne.s32.totalorder %s358, %s361
      %p370 = scmp.eq.s32.totalorder %s39, 3
      %p371 = por %p369, %p370
      %p372 = scmp.ne.s32.totalorder %s361, %s362
      %p373 = scmp.eq.s32.totalorder %s39, 0
      %p374 = por %p372, %p373
      %p375 = scmp.ne.s32.totalorder %s361, %s362
      %p376 = scmp.eq.s32.totalorder %s40, 3
      %p377 = por %p375, %p376
      %p379 = scmp.ne.s32.totalorder %s362, %s378
      %p380 = scmp.eq.s32.totalorder %s40, 0
      %p381 = por %p379, %p380
      %s382 = ssub.s32 %s42, %s49
      %p383 = scmp.eq.s32.totalorder %s382, 0
      %s385 = sadd.s32 %s384, 1
      %s386 = scalar_select %p383, %s384, %s385
      %p389 = pneg %p383
      %p390 = scmp.eq.s32.totalorder %s34, 3
      %p391 = por %p389, %p390
      %p392 = scmp.ne.s32.totalorder %s384, %s387
      %p393 = scmp.eq.s32.totalorder %s34, 0
      %p394 = por %p392, %p393
      %p395 = scmp.ne.s32.totalorder %s384, %s387
      %p396 = scmp.eq.s32.totalorder %s39, 3
      %p397 = por %p395, %p396
      %p398 = scmp.ne.s32.totalorder %s387, %s388
      %p399 = scmp.eq.s32.totalorder %s39, 0
      %p400 = por %p398, %p399
      %p401 = scmp.ne.s32.totalorder %s387, %s388
      %p402 = scmp.eq.s32.totalorder %s40, 3
      %p403 = por %p401, %p402
      %p405 = scmp.ne.s32.totalorder %s388, %s404
      %p406 = scmp.eq.s32.totalorder %s40, 0
      %p407 = por %p405, %p406
      %s408 = ssub.s32 %s42, %s49
      %p409 = scmp.eq.s32.totalorder %s408, 0
      %s411 = sadd.s32 %s410, 1
      %s412 = scalar_select %p409, %s410, %s411
      %p415 = pneg %p409
      %p416 = scmp.eq.s32.totalorder %s34, 3
      %p417 = por %p415, %p416
      %p418 = scmp.ne.s32.totalorder %s410, %s413
      %p419 = scmp.eq.s32.totalorder %s34, 0
      %p420 = por %p418, %p419
      %p421 = scmp.ne.s32.totalorder %s410, %s413
      %p422 = scmp.eq.s32.totalorder %s39, 3
      %p423 = por %p421, %p422
      %p424 = scmp.ne.s32.totalorder %s413, %s414
      %p425 = scmp.eq.s32.totalorder %s39, 0
      %p426 = por %p424, %p425
      %p427 = scmp.ne.s32.totalorder %s413, %s414
      %p428 = scmp.eq.s32.totalorder %s40, 3
      %p429 = por %p427, %p428
      %p431 = scmp.ne.s32.totalorder %s414, %s430
      %p432 = scmp.eq.s32.totalorder %s40, 0
      %p433 = por %p431, %p432
      %s434 = ssub.s32 %s42, %s49
      %p435 = scmp.eq.s32.totalorder %s434, 0
      %s437 = sadd.s32 %s436, 1
      %s438 = scalar_select %p435, %s436, %s437
      %p441 = pneg %p435
      %p442 = scmp.eq.s32.totalorder %s34, 3
      %p443 = por %p441, %p442
      %p444 = scmp.ne.s32.totalorder %s436, %s439
      %p445 = scmp.eq.s32.totalorder %s34, 0
      %p446 = por %p444, %p445
      %p447 = scmp.ne.s32.totalorder %s436, %s439
      %p448 = scmp.eq.s32.totalorder %s39, 3
      %p449 = por %p447, %p448
      %p450 = scmp.ne.s32.totalorder %s439, %s440
      %p451 = scmp.eq.s32.totalorder %s39, 0
      %p452 = por %p450, %p451
      %p453 = scmp.ne.s32.totalorder %s439, %s440
      %p454 = scmp.eq.s32.totalorder %s40, 3
      %p455 = por %p453, %p454
      %p457 = scmp.ne.s32.totalorder %s440, %s456
      %p458 = scmp.eq.s32.totalorder %s40, 0
      %p459 = por %p457, %p458
      %s461 = sadd.s32 %s460, 1
      %p464 = scmp.eq.s32.totalorder %s34, 3
      %p465 = scmp.ne.s32.totalorder %s460, %s462
      %p466 = scmp.eq.s32.totalorder %s34, 0
      %p467 = por %p465, %p466
      %p468 = scmp.ne.s32.totalorder %s460, %s462
      %p469 = scmp.eq.s32.totalorder %s39, 3
      %p470 = por %p468, %p469
      %p471 = scmp.ne.s32.totalorder %s462, %s463
      %p472 = scmp.eq.s32.totalorder %s39, 0
      %p473 = por %p471, %p472
      %p474 = scmp.ne.s32.totalorder %s462, %s463
      %p475 = scmp.eq.s32.totalorder %s40, 3
      %p476 = por %p474, %p475
      %p478 = scmp.ne.s32.totalorder %s463, %s477
      %p479 = scmp.eq.s32.totalorder %s40, 0
      %p480 = por %p478, %p479
      %s482 = sadd.s32 %s481, 1
      %p485 = scmp.eq.s32.totalorder %s34, 3
      %p486 = scmp.ne.s32.totalorder %s481, %s483
      %p487 = scmp.eq.s32.totalorder %s34, 0
      %p488 = por %p486, %p487
      %p489 = scmp.ne.s32.totalorder %s481, %s483
      %p490 = scmp.eq.s32.totalorder %s39, 3
      %p491 = por %p489, %p490
      %p492 = scmp.ne.s32.totalorder %s483, %s484
      %p493 = scmp.eq.s32.totalorder %s39, 0
      %p494 = por %p492, %p493
      %p495 = scmp.ne.s32.totalorder %s483, %s484
      %p496 = scmp.eq.s32.totalorder %s40, 3
      %p497 = por %p495, %p496
      %p499 = scmp.ne.s32.totalorder %s484, %s498
      %p500 = scmp.eq.s32.totalorder %s40, 0
      %p501 = por %p499, %p500
      %s502 = ssub.s32 %s41, %s53
      %p503 = scmp.eq.s32.totalorder %s502, 0
      %s505 = sadd.s32 %s504, 1
      %s506 = scalar_select %p503, %s504, %s505
      %p509 = pneg %p503
      %p510 = scmp.eq.s32.totalorder %s34, 3
      %p511 = por %p509, %p510
      %p512 = scmp.ne.s32.totalorder %s504, %s507
      %p513 = scmp.eq.s32.totalorder %s34, 0
      %p514 = por %p512, %p513
      %p515 = scmp.ne.s32.totalorder %s504, %s507
      %p516 = scmp.eq.s32.totalorder %s39, 3
      %p517 = por %p515, %p516
      %p518 = scmp.ne.s32.totalorder %s507, %s508
      %p519 = scmp.eq.s32.totalorder %s39, 0
      %p520 = por %p518, %p519
      %p521 = scmp.ne.s32.totalorder %s507, %s508
      %p522 = scmp.eq.s32.totalorder %s40, 3
      %p523 = por %p521, %p522
      %p525 = scmp.ne.s32.totalorder %s508, %s524
      %p526 = scmp.eq.s32.totalorder %s40, 0
      %p527 = por %p525, %p526
      %p528 = scmp.le.s32.totalorder 1, %s34
      %p529 = scmp.lt.s32.totalorder %s34, 5
      %p530 = pnand %p528, %p529
      %p531 = pneg %p530
      // Predicated region
      $region9: #{base_codex_clip_forward.3} parent=5 // pred_check
        _
      $region10: #{base_codex_clip_forward.3} parent=5 // pred_check_branch
        %533 = sbr.rel (%p530) target = $region12
      $region11: #{base_codex_clip_forward.3} parent=5 // pred_region
        %s534 = ssub.s32 %s34, 1
        // Predicated region
        $region13: #{base_codex_clip_forward.3} parent=11 // pred_check
          %p535 = pneg %p119
        $region14: #{base_codex_clip_forward.3} parent=11 // pred_check_branch
          %537 = sbr.rel (%p535) target = $region16
        $region15: #{base_codex_clip_forward.3} parent=11 // pred_region
          _
        $region16: #{base_codex_clip_forward.3} parent=11 // pred_fallthru
          _
        // Predicated region
        $region17: #{base_codex_clip_forward.3} parent=11 // pred_check
          %p538 = pneg %p140
        $region18: #{base_codex_clip_forward.3} parent=11 // pred_check_branch
          %540 = sbr.rel (%p538) target = $region20
        $region19: #{base_codex_clip_forward.3} parent=11 // pred_region
          _
        $region20: #{base_codex_clip_forward.3} parent=11 // pred_fallthru
          _
        // Predicated region
        $region21: #{base_codex_clip_forward.3} parent=11 // pred_check
          %p541 = pneg %p473
        $region22: #{base_codex_clip_forward.3} parent=11 // pred_check_branch
          %543 = sbr.rel (%p541) target = $region24
        $region23: #{base_codex_clip_forward.3} parent=11 // pred_region
          %545 = vsyncadd [#allocation12], 0
          %s546 = sshll.u32 %s16, 4
          %s547 = int_to_ptr.hbm [resolvable:$true] %s546
          %s548 = sshll.u32 [#allocation11], 4
          %s549 = int_to_ptr.vmem [resolvable:$true] %s548
          %554 = dma.hbm_to_vmem [thread:$0]  %s547, 1024, %s549, [#allocation12], 64, 64, 4
        $region24: #{base_codex_clip_forward.3} parent=11 // pred_fallthru
          _
        // Predicated region
        $region25: #{base_codex_clip_forward.3} parent=11 // pred_check
          %p555 = pneg %p494
        $region26: #{base_codex_clip_forward.3} parent=11 // pred_check_branch
          %557 = sbr.rel (%p555) target = $region28
        $region27: #{base_codex_clip_forward.3} parent=11 // pred_region
          _
        $region28: #{base_codex_clip_forward.3} parent=11 // pred_fallthru
          _
      $region12: #{base_codex_clip_forward.3} parent=5 // pred_fallthru
        _
      %p558 = scmp.lt.s32.totalorder %s34, 4
      // Predicated region
      $region29: #{base_codex_clip_forward.3} parent=5 // pred_check
        %p559 = pneg %p558
      $region30: #{base_codex_clip_forward.3} parent=5 // pred_check_branch
        %561 = sbr.rel (%p559) target = $region32
      $region31: #{base_codex_clip_forward.3} parent=5 // pred_region
        // Predicated region
        $region33: #{base_codex_clip_forward.3} parent=31 // pred_check
          %p562 = pneg %p66
        $region34: #{base_codex_clip_forward.3} parent=31 // pred_check_branch
          %564 = sbr.rel (%p562) target = $region36
        $region35: #{base_codex_clip_forward.3} parent=31 // pred_region
          %p565 = scmp.lt.s32.totalorder %s41, 1
          %s566 = scalar_select %p565, %s41, 1
          %s567 = scalar_lea.vmem %s0, %s566
        $region36: #{base_codex_clip_forward.3} parent=31 // pred_fallthru
          _
        // Predicated region
        $region37: #{base_codex_clip_forward.3} parent=31 // pred_check
          %p568 = pneg %p92
        $region38: #{base_codex_clip_forward.3} parent=31 // pred_check_branch
          %570 = sbr.rel (%p568) target = $region40
        $region39: #{base_codex_clip_forward.3} parent=31 // pred_region
          %p571 = scmp.lt.s32.totalorder %s41, 1
          %s572 = scalar_select %p571, %s41, 1
          %s573 = smul.addr %s572, 8
          %s574 = scalar_lea.vmem %s1, %s573
        $region40: #{base_codex_clip_forward.3} parent=31 // pred_fallthru
          _
        // Predicated region
        $region41: #{base_codex_clip_forward.3} parent=31 // pred_check
          %p575 = pneg %p160
        $region42: #{base_codex_clip_forward.3} parent=31 // pred_check_branch
          %577 = sbr.rel (%p575) target = $region44
        $region43: #{base_codex_clip_forward.3} parent=31 // pred_region
          %s578 = sand.u32 %s150, 1
          %s579 = scalar_lea.sflag [#allocation6], %s578
          %s580 = sand.u32 %s150, 1
          %s581 = smul.addr %s580, 192
          %s582 = scalar_lea.vmem [#allocation5], %s581
          %584 = vsyncadd %s579, 0
          %s585 = smul.addr %s42, 48
          %s586 = smul.addr %s585, 4
          %s587 = scalar_lea.hbm %s4, %s586
          %s588 = sshll.u32 %s587, 4
          %s589 = int_to_ptr.hbm [resolvable:$true] %s588
          %s590 = sshll.u32 %s582, 4
          %s591 = int_to_ptr.vmem [resolvable:$true] %s590
          %596 = dma.hbm_to_vmem [thread:$0]  %s589, 3072, %s591, %s579, 192, 192, 12
        $region44: #{base_codex_clip_forward.3} parent=31 // pred_fallthru
          _
        // Predicated region
        $region45: #{base_codex_clip_forward.3} parent=31 // pred_check
          %p597 = pneg %p186
        $region46: #{base_codex_clip_forward.3} parent=31 // pred_check_branch
          %599 = sbr.rel (%p597) target = $region48
        $region47: #{base_codex_clip_forward.3} parent=31 // pred_region
          %p600 = scmp.lt.s32.totalorder %s42, 1
          %s601 = scalar_select %p600, %s42, 1
          %s602 = smul.addr %s601, 3
          %s603 = scalar_lea.vmem %s5, %s602
        $region48: #{base_codex_clip_forward.3} parent=31 // pred_fallthru
          _
        // Predicated region
        $region49: #{base_codex_clip_forward.3} parent=31 // pred_check
          %p604 = pneg %p212
        $region50: #{base_codex_clip_forward.3} parent=31 // pred_check_branch
          %606 = sbr.rel (%p604) target = $region52
        $region51: #{base_codex_clip_forward.3} parent=31 // pred_region
          %p607 = scmp.lt.s32.totalorder %s42, 1
          %s608 = scalar_select %p607, %s42, 1
          %s609 = smul.addr %s608, 16
          %s610 = smul.addr %s609, 4
          %s611 = scalar_lea.vmem %s6, %s610
        $region52: #{base_codex_clip_forward.3} parent=31 // pred_fallthru
          _
        // Predicated region
        $region53: #{base_codex_clip_forward.3} parent=31 // pred_check
          %p612 = pneg %p238
        $region54: #{base_codex_clip_forward.3} parent=31 // pred_check_branch
          %614 = sbr.rel (%p612) target = $region56
        $region55: #{base_codex_clip_forward.3} parent=31 // pred_region
          %p615 = scmp.lt.s32.totalorder %s42, 1
          %s616 = scalar_select %p615, %s42, 1
          %s617 = scalar_lea.vmem %s7, %s616
        $region56: #{base_codex_clip_forward.3} parent=31 // pred_fallthru
          _
        // Predicated region
        $region57: #{base_codex_clip_forward.3} parent=31 // pred_check
          %p618 = pneg %p264
        $region58: #{base_codex_clip_forward.3} parent=31 // pred_check_branch
          %620 = sbr.rel (%p618) target = $region60
        $region59: #{base_codex_clip_forward.3} parent=31 // pred_region
          %p621 = scmp.lt.s32.totalorder %s42, 1
          %s622 = scalar_select %p621, %s42, 1
          %s623 = scalar_lea.vmem %s8, %s622
        $region60: #{base_codex_clip_forward.3} parent=31 // pred_fallthru
          _
        // Predicated region
        $region61: #{base_codex_clip_forward.3} parent=31 // pred_check
          %p624 = pneg %p290
        $region62: #{base_codex_clip_forward.3} parent=31 // pred_check_branch
          %626 = sbr.rel (%p624) target = $region64
        $region63: #{base_codex_clip_forward.3} parent=31 // pred_region
          %p627 = scmp.lt.s32.totalorder %s42, 1
          %s628 = scalar_select %p627, %s42, 1
          %s629 = scalar_lea.vmem %s9, %s628
        $region64: #{base_codex_clip_forward.3} parent=31 // pred_fallthru
          _
        // Predicated region
        $region65: #{base_codex_clip_forward.3} parent=31 // pred_check
          %p630 = pneg %p316
        $region66: #{base_codex_clip_forward.3} parent=31 // pred_check_branch
          %632 = sbr.rel (%p630) target = $region68
        $region67: #{base_codex_clip_forward.3} parent=31 // pred_region
          %s633 = sand.u32 %s34, 1
          %s634 = scalar_lea.sflag [#allocation9], %s633
          %s635 = sand.u32 %s306, 1
          %s636 = smul.addr %s635, 128
          %s637 = scalar_lea.vmem [#allocation8], %s636
          %639 = vsyncadd %s634, 0
          %s640 = smul.addr %s42, 32
          %s641 = smul.addr %s640, 4
          %s642 = scalar_lea.hbm %s10, %s641
          %s643 = sshll.u32 %s642, 4
          %s644 = int_to_ptr.hbm [resolvable:$true] %s643
          %s645 = sshll.u32 %s637, 4
          %s646 = int_to_ptr.vmem [resolvable:$true] %s645
          %651 = dma.hbm_to_vmem [thread:$0]  %s644, 2048, %s646, %s634, 128, 128, 8
        $region68: #{base_codex_clip_forward.3} parent=31 // pred_fallthru
          _
        // Predicated region
        $region69: #{base_codex_clip_forward.3} parent=31 // pred_check
          %p652 = pneg %p342
        $region70: #{base_codex_clip_forward.3} parent=31 // pred_check_branch
          %654 = sbr.rel (%p652) target = $region72
        $region71: #{base_codex_clip_forward.3} parent=31 // pred_region
          %p655 = scmp.lt.s32.totalorder %s42, 1
          %s656 = scalar_select %p655, %s42, 1
          %s657 = smul.addr %s656, 2
          %s658 = scalar_lea.vmem %s11, %s657
        $region72: #{base_codex_clip_forward.3} parent=31 // pred_fallthru
          _
        // Predicated region
        $region73: #{base_codex_clip_forward.3} parent=31 // pred_check
          %p659 = pneg %p368
        $region74: #{base_codex_clip_forward.3} parent=31 // pred_check_branch
          %661 = sbr.rel (%p659) target = $region76
        $region75: #{base_codex_clip_forward.3} parent=31 // pred_region
          %s662 = sand.u32 %s34, 1
          %s663 = scalar_lea.sflag [#allocation9], %s662
          %s664 = sand.u32 %s358, 1
          %s665 = smul.addr %s664, 128
          %s666 = scalar_lea.vmem [#allocation10], %s665
          %668 = vsyncadd %s663, 0
          %s669 = smul.addr %s42, 32
          %s670 = smul.addr %s669, 4
          %s671 = scalar_lea.hbm %s12, %s670
          %s672 = sshll.u32 %s671, 4
          %s673 = int_to_ptr.hbm [resolvable:$true] %s672
          %s674 = sshll.u32 %s666, 4
          %s675 = int_to_ptr.vmem [resolvable:$true] %s674
          %680 = dma.hbm_to_vmem [thread:$0]  %s673, 2048, %s675, %s663, 64, 64, 4
        $region76: #{base_codex_clip_forward.3} parent=31 // pred_fallthru
          _
        // Predicated region
        $region77: #{base_codex_clip_forward.3} parent=31 // pred_check
          %p681 = pneg %p394
        $region78: #{base_codex_clip_forward.3} parent=31 // pred_check_branch
          %683 = sbr.rel (%p681) target = $region80
        $region79: #{base_codex_clip_forward.3} parent=31 // pred_region
          %p684 = scmp.lt.s32.totalorder %s42, 1
          %s685 = scalar_select %p684, %s42, 1
          %s686 = scalar_lea.vmem %s13, %s685
        $region80: #{base_codex_clip_forward.3} parent=31 // pred_fallthru
          _
        // Predicated region
        $region81: #{base_codex_clip_forward.3} parent=31 // pred_check
          %p687 = pneg %p420
        $region82: #{base_codex_clip_forward.3} parent=31 // pred_check_branch
          %689 = sbr.rel (%p687) target = $region84
        $region83: #{base_codex_clip_forward.3} parent=31 // pred_region
          %p690 = scmp.lt.s32.totalorder %s42, 1
          %s691 = scalar_select %p690, %s42, 1
          %s692 = scalar_lea.vmem %s14, %s691
        $region84: #{base_codex_clip_forward.3} parent=31 // pred_fallthru
          _
        // Predicated region
        $region85: #{base_codex_clip_forward.3} parent=31 // pred_check
          %p693 = pneg %p446
        $region86: #{base_codex_clip_forward.3} parent=31 // pred_check_branch
          %695 = sbr.rel (%p693) target = $region88
        $region87: #{base_codex_clip_forward.3} parent=31 // pred_region
          %p696 = scmp.lt.s32.totalorder %s42, 1
          %s697 = scalar_select %p696, %s42, 1
          %s698 = scalar_lea.vmem %s15, %s697
        $region88: #{base_codex_clip_forward.3} parent=31 // pred_fallthru
          _
      $region32: #{base_codex_clip_forward.3} parent=5 // pred_fallthru
        _
      %p699 = scmp.le.s32.totalorder 1, %s34
      %p700 = scmp.lt.s32.totalorder %s34, 5
      %p701 = pnand %p699, %p700
      %p702 = pneg %p701
      // Predicated region
      $region89: #{base_codex_clip_forward.3} parent=5 // pred_check
        _
      $region90: #{base_codex_clip_forward.3} parent=5 // pred_check_branch
        %704 = sbr.rel (%p701) target = $region92
      $region91: #{base_codex_clip_forward.3} parent=5 // pred_region
        %s705 = ssub.s32 %s34, 1
        %s706 = sand.u32 %s153, 1
        %s707 = scalar_lea.sflag [#allocation6], %s706
        %s708 = sand.u32 %s153, 1
        %s709 = smul.addr %s708, 192
        %s710 = scalar_lea.vmem [#allocation5], %s709
        // Predicated region
        $region93: #{base_codex_clip_forward.3} parent=91 // pred_check
          %p711 = pneg %p166
        $region94: #{base_codex_clip_forward.3} parent=91 // pred_check_branch
          %713 = sbr.rel (%p711) target = $region96
        $region95: #{base_codex_clip_forward.3} parent=91 // pred_region
          %715 = dma.done %s707, 3072
        $region96: #{base_codex_clip_forward.3} parent=91 // pred_fallthru
          _
        %s716 = sand.u32 %s39, 1
        %s717 = scalar_lea.sflag [#allocation9], %s716
        %s718 = sand.u32 %s309, 1
        %s719 = smul.addr %s718, 128
        %s720 = scalar_lea.vmem [#allocation8], %s719
        // Predicated region
        $region97: #{base_codex_clip_forward.3} parent=91 // pred_check
          %p721 = pneg %p322
        $region98: #{base_codex_clip_forward.3} parent=91 // pred_check_branch
          %723 = sbr.rel (%p721) target = $region100
        $region99: #{base_codex_clip_forward.3} parent=91 // pred_region
          %725 = dma.done %s717, 2048
        $region100: #{base_codex_clip_forward.3} parent=91 // pred_fallthru
          _
        %s726 = sand.u32 %s39, 1
        %s727 = scalar_lea.sflag [#allocation9], %s726
        %s728 = sand.u32 %s361, 1
        %s729 = smul.addr %s728, 128
        %s730 = scalar_lea.vmem [#allocation10], %s729
        // Predicated region
        $region101: #{base_codex_clip_forward.3} parent=91 // pred_check
          %p731 = pneg %p374
        $region102: #{base_codex_clip_forward.3} parent=91 // pred_check_branch
          %733 = sbr.rel (%p731) target = $region104
        $region103: #{base_codex_clip_forward.3} parent=91 // pred_region
          %735 = dma.done %s727, 2048
        $region104: #{base_codex_clip_forward.3} parent=91 // pred_fallthru
          _
        // Predicated region
        $region105: #{base_codex_clip_forward.3} parent=91 // pred_check
          %p736 = pneg %p473
        $region106: #{base_codex_clip_forward.3} parent=91 // pred_check_branch
          %738 = sbr.rel (%p736) target = $region108
        $region107: #{base_codex_clip_forward.3} parent=91 // pred_region
          %740 = dma.done [#allocation12], 1024
        $region108: #{base_codex_clip_forward.3} parent=91 // pred_fallthru
          _
        %p741 = scmp.lt.s32.totalorder %s43, 1
        %s742 = scalar_select %p741, %s43, 1
        %s743 = scalar_lea.vmem %s0, %s742
        %p744 = pneg %p72
        %p745 = pneg %p69
        %p746 = scmp.lt.s32.totalorder %s43, 1
        %s747 = scalar_select %p746, %s43, 1
        %s748 = smul.addr %s747, 8
        %s749 = scalar_lea.vmem %s1, %s748
        %p750 = pneg %p98
        %p751 = pneg %p95
        %p752 = pneg %p119
        %p753 = pneg %p116
        %p754 = pneg %p140
        %p755 = pneg %p137
        %s756 = sand.u32 %s153, 1
        %s757 = scalar_lea.sflag [#allocation6], %s756
        %s758 = sand.u32 %s153, 1
        %s759 = smul.addr %s758, 192
        %s760 = scalar_lea.vmem [#allocation5], %s759
        %p761 = pneg %p166
        %p762 = pneg %p163
        %p763 = scmp.lt.s32.totalorder %s44, 1
        %s764 = scalar_select %p763, %s44, 1
        %s765 = smul.addr %s764, 3
        %s766 = scalar_lea.vmem %s5, %s765
        %p767 = pneg %p192
        %p768 = pneg %p189
        %p769 = scmp.lt.s32.totalorder %s44, 1
        %s770 = scalar_select %p769, %s44, 1
        %s771 = smul.addr %s770, 16
        %s772 = smul.addr %s771, 4
        %s773 = scalar_lea.vmem %s6, %s772
        %p774 = pneg %p218
        %p775 = pneg %p215
        %p776 = scmp.lt.s32.totalorder %s44, 1
        %s777 = scalar_select %p776, %s44, 1
        %s778 = scalar_lea.vmem %s7, %s777
        %p779 = pneg %p244
        %p780 = pneg %p241
        %p781 = scmp.lt.s32.totalorder %s44, 1
        %s782 = scalar_select %p781, %s44, 1
        %s783 = scalar_lea.vmem %s8, %s782
        %p784 = pneg %p270
        %p785 = pneg %p267
        %p786 = scmp.lt.s32.totalorder %s44, 1
        %s787 = scalar_select %p786, %s44, 1
        %s788 = scalar_lea.vmem %s9, %s787
        %p789 = pneg %p296
        %p790 = pneg %p293
        %s791 = sand.u32 %s39, 1
        %s792 = scalar_lea.sflag [#allocation9], %s791
        %s793 = sand.u32 %s309, 1
        %s794 = smul.addr %s793, 128
        %s795 = scalar_lea.vmem [#allocation8], %s794
        %p796 = pneg %p322
        %p797 = pneg %p319
        %p798 = scmp.lt.s32.totalorder %s44, 1
        %s799 = scalar_select %p798, %s44, 1
        %s800 = smul.addr %s799, 2
        %s801 = scalar_lea.vmem %s11, %s800
        %p802 = pneg %p348
        %p803 = pneg %p345
        %s804 = sand.u32 %s39, 1
        %s805 = scalar_lea.sflag [#allocation9], %s804
        %s806 = sand.u32 %s361, 1
        %s807 = smul.addr %s806, 128
        %s808 = scalar_lea.vmem [#allocation10], %s807
        %p809 = pneg %p374
        %p810 = pneg %p371
        %p811 = scmp.lt.s32.totalorder %s44, 1
        %s812 = scalar_select %p811, %s44, 1
        %s813 = scalar_lea.vmem %s13, %s812
        %p814 = pneg %p400
        %p815 = pneg %p397
        %p816 = scmp.lt.s32.totalorder %s44, 1
        %s817 = scalar_select %p816, %s44, 1
        %s818 = scalar_lea.vmem %s14, %s817
        %p819 = pneg %p426
        %p820 = pneg %p423
        %p821 = scmp.lt.s32.totalorder %s44, 1
        %s822 = scalar_select %p821, %s44, 1
        %s823 = scalar_lea.vmem %s15, %s822
        %p824 = pneg %p452
        %p825 = pneg %p449
        %p826 = pneg %p473
        %p827 = pneg %p470
        %p828 = pneg %p494
        %p829 = pneg %p491
        %p830 = pneg %p520
        %p831 = pneg %p517
        %s832 = sand.u32 %s507, 1
        %s833 = scalar_lea.sflag [#allocation7], %s832
        %s834 = sand.u32 %s507, 1
        %s835 = scalar_lea.vmem [#allocation13], %s834
        %p836 = scmp.lt.s32.totalorder %s43, 1
        %s837 = scalar_select %p836, %s43, 1
        %s838 = scalar_lea.vmem %s0, %s837
        %p839 = scmp.lt.s32.totalorder %s43, 1
        %s840 = scalar_select %p839, %s43, 1
        %s841 = smul.addr %s840, 8
        %s842 = scalar_lea.vmem %s1, %s841
        %p843 = scmp.lt.s32.totalorder %s44, 1
        %s844 = scalar_select %p843, %s44, 1
        %s845 = smul.addr %s844, 3
        %s846 = scalar_lea.vmem %s5, %s845
        %p847 = scmp.lt.s32.totalorder %s44, 1
        %s848 = scalar_select %p847, %s44, 1
        %s849 = smul.addr %s848, 16
        %s850 = smul.addr %s849, 4
        %s851 = scalar_lea.vmem %s6, %s850
        %p852 = scmp.lt.s32.totalorder %s44, 1
        %s853 = scalar_select %p852, %s44, 1
        %s854 = scalar_lea.vmem %s7, %s853
        %p855 = scmp.lt.s32.totalorder %s44, 1
        %s856 = scalar_select %p855, %s44, 1
        %s857 = scalar_lea.vmem %s8, %s856
        %p858 = scmp.lt.s32.totalorder %s44, 1
        %s859 = scalar_select %p858, %s44, 1
        %s860 = scalar_lea.vmem %s9, %s859
        %p861 = scmp.lt.s32.totalorder %s44, 1
        %s862 = scalar_select %p861, %s44, 1
        %s863 = smul.addr %s862, 2
        %s864 = scalar_lea.vmem %s11, %s863
        %p865 = scmp.lt.s32.totalorder %s44, 1
        %s866 = scalar_select %p865, %s44, 1
        %s867 = scalar_lea.vmem %s13, %s866
        %p868 = scmp.lt.s32.totalorder %s44, 1
        %s869 = scalar_select %p868, %s44, 1
        %s870 = scalar_lea.vmem %s14, %s869
        %p871 = scmp.lt.s32.totalorder %s44, 1
        %s872 = scalar_select %p871, %s44, 1
        %s873 = scalar_lea.vmem %s15, %s872
        %p875 = scmp.eq.s32.totalorder %s44, 0
        // Predicated region
        $region109: #{base_codex_clip_forward.3} parent=91 // pred_check
          %p876 = pneg %p875
        $region110: #{base_codex_clip_forward.3} parent=91 // pred_check_branch
          %878 = sbr.rel (%p876) target = $region112
        $region111: #{base_codex_clip_forward.3} parent=91 // pred_region
          %v879 = vld [vmem:[%s842] sm:$0xff]
          %v880 = vld [vmem:[%s2] sm:$0x1]
          %v881 = vld [vmem:[%s3] sm:$0x1]
          %882 = vadd.xlane.f32.xlu0 %v879
          %v883 = vpop.xlane.xlu0 %882
          %v884 = vrcp.pop 128.0
          %v885 = vmul.f32 128.0, %v884
          %v886 = vsub.f32 1.0, %v885
          %v887 = vmul.f32 %v884, %v886
          %v888 = vadd.f32 %v884, %v887
          %vm889 = vweird.f32 %v884
          %v890 = vsel %vm889, %v884, %v888
          %v891 = vmul.f32 %v883, %v890
          %v892 = vsub.f32 %v879, %v891
          %v893 = vmul.f32 %v892, %v892
          %894 = vadd.xlane.f32.xlu0 %v893
          %v895 = vpop.xlane.xlu0 %894
          %v896 = vmul.f32 %v895, %v890
          %v897 = vadd.f32 %v896, 1e-12
          %v898 = vrsqrt.pop %v897
          %v899 = vmul.f32 %v898, %v897
          %v900 = vmul.f32 %v899, %v898
          %v901 = vmul.f32 0.5, %v900
          %v902 = vsub.f32 1.5, %v901
          %v903 = vmul.f32 %v898, %v902
          %vm904 = vweird.f32 %v897
          %vm905 = vweird.f32 %v898
          %vm906 = vmor %vm904, %vm905
          %v907 = vsel %vm906, %v898, %v903
          %v908 = vmul.f32 %v892, %v907
          %v910 = vperm.slane %v880, 0
          %v912 = vmul.f32 %v908, %v910
          %v914 = vperm.slane %v881, 0
          %v916 = vadd.f32 %v912, %v914
          %917 = vst [vmem:[#allocation2] sm:$0xff] %v916
        $region112: #{base_codex_clip_forward.3} parent=91 // pred_fallthru
          _
        %v918 = vld [vmem:[#allocation2] sm:$0xff]
        %v919 = vpack.c.bf16 %v918, %v918
        %v920 = vld [vmem:[%s838] sm:$0x1]
        %v921 = vld [vmem:[%s710] sm:$0xff]
        %v922 = vld [vmem:[%s710 + $0x8] sm:$0xf]
        %v923 = vld [vmem:[%s710 + $0xc] sm:$0xff]
        %v924 = vld [vmem:[%s710 + $0x14] sm:$0xf]
        %v925 = vld [vmem:[%s710 + $0x18] sm:$0xff]
        %v926 = vld [vmem:[%s710 + $0x20] sm:$0xf]
        %v927 = vld [vmem:[%s710 + $0x24] sm:$0xff]
        %v928 = vld [vmem:[%s710 + $0x2c] sm:$0xf]
        %v929 = vld [vmem:[%s710 + $0x30] sm:$0xff]
        %v930 = vld [vmem:[%s710 + $0x38] sm:$0xf]
        %v931 = vld [vmem:[%s710 + $0x3c] sm:$0xff]
        %v932 = vld [vmem:[%s710 + $0x44] sm:$0xf]
        %v933 = vld [vmem:[%s710 + $0x48] sm:$0xff]
        %v934 = vld [vmem:[%s710 + $0x50] sm:$0xf]
        %v935 = vld [vmem:[%s710 + $0x54] sm:$0xff]
        %v936 = vld [vmem:[%s710 + $0x5c] sm:$0xf]
        %v937 = vld [vmem:[%s710 + $0x60] sm:$0xff]
        %v938 = vld [vmem:[%s710 + $0x68] sm:$0xf]
        %v939 = vld [vmem:[%s710 + $0x6c] sm:$0xff]
        %v940 = vld [vmem:[%s710 + $0x74] sm:$0xf]
        %v941 = vld [vmem:[%s710 + $0x78] sm:$0xff]
        %v942 = vld [vmem:[%s710 + $0x80] sm:$0xf]
        %v943 = vld [vmem:[%s710 + $0x84] sm:$0xff]
        %v944 = vld [vmem:[%s710 + $0x8c] sm:$0xf]
        %v945 = vld [vmem:[%s710 + $0x90] sm:$0xff]
        %v946 = vld [vmem:[%s710 + $0x98] sm:$0xf]
        %v947 = vld [vmem:[%s710 + $0x9c] sm:$0xff]
        %v948 = vld [vmem:[%s710 + $0xa4] sm:$0xf]
        %v949 = vld [vmem:[%s710 + $0xa8] sm:$0xff]
        %v950 = vld [vmem:[%s710 + $0xb0] sm:$0xf]
        %v951 = vld [vmem:[%s710 + $0xb4] sm:$0xff]
        %v952 = vld [vmem:[%s710 + $0xbc] sm:$0xf]
        %v953 = vld [vmem:[%s846] sm:$0x7]
        %v955 = vperm.slane %v953, 0
        %v956 = vperm.slane %v953, 1
        %v957 = vperm.slane %v953, 2
        %v993 = vunpack.c.l.b16 %v921
        %v994 = vunpack.c.h.b16 %v921
        %v995 = vunpack.c.l.b16 %v922
        %v996 = vunpack.c.l.b16 %v923
        %v997 = vunpack.c.h.b16 %v923
        %v998 = vunpack.c.l.b16 %v924
        %v999 = vunpack.c.l.b16 %v925
        %v1000 = vunpack.c.h.b16 %v925
        %v1001 = vunpack.c.l.b16 %v926
        %v1002 = vunpack.c.l.b16 %v927
        %v1003 = vunpack.c.h.b16 %v927
        %v1004 = vunpack.c.l.b16 %v928
        %v1005 = vunpack.c.l.b16 %v929
        %v1006 = vunpack.c.h.b16 %v929
        %v1007 = vunpack.c.l.b16 %v930
        %v1008 = vunpack.c.l.b16 %v931
        %v1009 = vunpack.c.h.b16 %v931
        %v1010 = vunpack.c.l.b16 %v932
        %v1011 = vunpack.c.l.b16 %v933
        %v1012 = vunpack.c.h.b16 %v933
        %v1013 = vunpack.c.l.b16 %v934
        %v1014 = vunpack.c.l.b16 %v935
        %v1015 = vunpack.c.h.b16 %v935
        %v1016 = vunpack.c.l.b16 %v936
        %v1017 = vunpack.c.l.b16 %v937
        %v1018 = vunpack.c.h.b16 %v937
        %v1019 = vunpack.c.l.b16 %v938
        %v1020 = vunpack.c.l.b16 %v939
        %v1021 = vunpack.c.h.b16 %v939
        %v1022 = vunpack.c.l.b16 %v940
        %v1023 = vunpack.c.l.b16 %v941
        %v1024 = vunpack.c.h.b16 %v941
        %v1025 = vunpack.c.l.b16 %v942
        %v1026 = vunpack.c.l.b16 %v943
        %v1027 = vunpack.c.h.b16 %v943
        %v1028 = vunpack.c.l.b16 %v944
        %v1029 = vunpack.c.l.b16 %v945
        %v1030 = vunpack.c.h.b16 %v945
        %v1031 = vunpack.c.l.b16 %v946
        %v1032 = vunpack.c.l.b16 %v947
        %v1033 = vunpack.c.h.b16 %v947
        %v1034 = vunpack.c.l.b16 %v948
        %v1035 = vunpack.c.l.b16 %v949
        %v1036 = vunpack.c.h.b16 %v949
        %v1037 = vunpack.c.l.b16 %v950
        %v1038 = vunpack.c.l.b16 %v951
        %v1039 = vunpack.c.h.b16 %v951
        %v1040 = vunpack.c.l.b16 %v952
        %v1041 = vpack.c.b16 %v996, %v993
        %v1042 = vpack.c.b16 %v997, %v994
        %v1043 = vpack.c.b16 %v998, %v995
        %v1044 = vpack.c.b16 %v1002, %v999
        %v1045 = vpack.c.b16 %v1003, %v1000
        %v1046 = vpack.c.b16 %v1004, %v1001
        %v1047 = vpack.c.b16 %v1008, %v1005
        %v1048 = vpack.c.b16 %v1009, %v1006
        %v1049 = vpack.c.b16 %v1010, %v1007
        %v1050 = vpack.c.b16 %v1014, %v1011
        %v1051 = vpack.c.b16 %v1015, %v1012
        %v1052 = vpack.c.b16 %v1016, %v1013
        %v1053 = vpack.c.b16 %v1020, %v1017
        %v1054 = vpack.c.b16 %v1021, %v1018
        %v1055 = vpack.c.b16 %v1022, %v1019
        %v1056 = vpack.c.b16 %v1026, %v1023
        %v1057 = vpack.c.b16 %v1027, %v1024
        %v1058 = vpack.c.b16 %v1028, %v1025
        %v1059 = vpack.c.b16 %v1032, %v1029
        %v1060 = vpack.c.b16 %v1033, %v1030
        %v1061 = vpack.c.b16 %v1034, %v1031
        %v1062 = vpack.c.b16 %v1038, %v1035
        %v1063 = vpack.c.b16 %v1039, %v1036
        %v1064 = vpack.c.b16 %v1040, %v1037
        %1089 = vmatpush.bf16.msra.mxu0 %v1062
        %1090 = vmatpush.bf16.msra.mxu0 %v1059
        %1091 = vmatpush.bf16.msra.mxu0 %v1056
        %1092 = vmatpush.bf16.msra.mxu0 %v1053
        %1093 = vmatpush.bf16.msra.mxu0 %v1050
        %1094 = vmatpush.bf16.msra.mxu0 %v1047
        %1095 = vmatpush.bf16.msra.mxu0 %v1044
        %1096 = vmatpush.bf16.msra.mxu0 %v1041
        %1097 = vmatmul.bf16.gmra.mxu0 %v919
        %v1098 = vpop.f32.mrf.mxu0
        %v1099 = vadd.f32 %v955, %v1098
        %v1100 = vpop.f32.mrf.mxu0
        %1101 = vdwg.mxu0
        %1102 = vmatpush.bf16.msra.mxu0 %v1063
        %1103 = vmatpush.bf16.msra.mxu0 %v1060
        %1104 = vmatpush.bf16.msra.mxu0 %v1057
        %1105 = vmatpush.bf16.msra.mxu0 %v1054
        %1106 = vmatpush.bf16.msra.mxu0 %v1051
        %1107 = vmatpush.bf16.msra.mxu0 %v1048
        %1108 = vmatpush.bf16.msra.mxu0 %v1045
        %1109 = vmatpush.bf16.msra.mxu0 %v1042
        %1110 = vmatmul.bf16.gmra.mxu0 %v919
        %v1111 = vpop.f32.mrf.mxu0
        %v1112 = vadd.f32 %v956, %v1111
        %v1113 = vpop.f32.mrf.mxu0
        %1114 = vdwg.mxu0
        %1115 = vmatpush.bf16.msra.mxu0 %v1064
        %1116 = vmatpush.bf16.msra.mxu0 %v1061
        %1117 = vmatpush.bf16.msra.mxu0 %v1058
        %1118 = vmatpush.bf16.msra.mxu0 %v1055
        %1119 = vmatpush.bf16.msra.mxu0 %v1052
        %1120 = vmatpush.bf16.msra.mxu0 %v1049
        %1121 = vmatpush.bf16.msra.mxu0 %v1046
        %1122 = vmatpush.bf16.msra.mxu0 %v1043
        %1123 = vmatmul.bf16.gmra.mxu0 %v919
        %v1124 = vpop.f32.mrf.mxu0
        %v1125 = vadd.f32 %v957, %v1124
        %v1126 = vpop.f32.mrf.mxu0
        %1127 = vdwg.mxu0
        %v1128 = vpack.c.bf16 %v1112, %v1099
        %v1129 = vpack.c.bf16 %v1125, %v1125
        %1130 = vst [vmem:[#allocation3] sm:$0xff] %v1128
        %1131 = vst [vmem:[#allocation3 + $0x8] sm:$0xf] %v1129
        %v1132 = vld [vmem:[#allocation3] sm:$0xf]
        %v1133 = vld [vmem:[#allocation3 + $0x4] sm:$0xf]
        %v1134 = vld [vmem:[#allocation3 + $0x8] sm:$0xf]
        %vm1135 = vcmask 261120
        %v1137 = vsel %vm1135, %v1132, 0
        %v1140 = vsel %vm1135, %v1133, 0
        %1142 = vmatpush.bf16.xpose.msra.mxu0 0
        %1143 = vmatpush.bf16.xpose.msra.mxu0 0
        %1144 = vmatpush.bf16.xpose.msra.mxu0 0
        %1145 = vmatpush.bf16.xpose.msra.mxu0 0
        %1146 = vmatpush.bf16.xpose.msra.mxu0 0
        %1147 = vmatpush.bf16.xpose.msra.mxu0 0
        %1148 = vmatpush.bf16.xpose.msra.mxu0 0
        %1149 = vmatpush.bf16.xpose.msra.mxu0 %v1140
        %1150 = vmatmul.bf16.gmra.mxu0 %v1137
        %v1151 = vpop.f32.mrf.mxu0
        %v1152 = vadd.f32 0.0, %v1151
        %v1153 = vpop.f32.mrf.mxu0
        %1154 = vdwg.mxu0
        %v1155 = vmul.f32 %v1152, 0.17677669
        %v1157 = vperm.slane %v920, 0
        %v1159 = vadd.f32 %v1155, %v1157
        %vm1160 = vcmask 64512
        %v1161 = vsel %vm1160, %v1159, -inf
        %1162 = vmax.xlane.f32.xlu0 %v1161
        %v1163 = vpop.xlane.xlu0 %1162
        %v1164 = vsub.f32 %v1159, %v1163
        %v1165 = vmul.f32 %v1164, 1.442695
        %v1166 = vpow.pop %v1165
        %v1167 = vsel %vm1160, %v1166, 0.0
        %1168 = vadd.xlane.f32.xlu0 %v1167
        %v1169 = vpop.xlane.xlu0 %1168
        %v1170 = vrcp.pop %v1169
        %v1171 = vmul.f32 %v1166, %v1170
        %v1172 = vpack.c.bf16 %v1171, %v1171
        %v1174 = vsel %vm1160, %v1172, 0
        %vm1176 = vcmask 1043456
        %v1178 = vsel %vm1176, %v1134, 0
        %1180 = vmatpush.bf16.msra.mxu0 0
        %1181 = vmatpush.bf16.msra.mxu0 0
        %1182 = vmatpush.bf16.msra.mxu0 0
        %1183 = vmatpush.bf16.msra.mxu0 0
        %1184 = vmatpush.bf16.msra.mxu0 0
        %1185 = vmatpush.bf16.msra.mxu0 0
        %1186 = vmatpush.bf16.msra.mxu0 0
        %1187 = vmatpush.bf16.msra.mxu0 %v1178
        %1188 = vmatmul.bf16.gmra.mxu0 %v1174
        %v1189 = vpop.f32.mrf.mxu0
        %v1190 = vadd.f32 0.0, %v1189
        %v1191 = vpop.f32.mrf.mxu0
        %1192 = vdwg.mxu0
        %1193 = vst.msk [vmem:[#allocation4] sm:$0xff] %vm1135, %v1190
        %v1194 = vld [vmem:[#allocation3] sm:$0xf]
        %v1195 = vld [vmem:[#allocation3 + $0x4] sm:$0xf]
        %v1196 = vld [vmem:[#allocation3 + $0x8] sm:$0xf]
        %v1198 = vunpack.c.l.b16 %v1194
        %v1199 = vpack.c.b16 %v1198, %v1198
        %1200 = vrot.lane.b32.xlu0 %v1199, 96
        %v1201 = vpop.permute.xlu0 %1200
        %v1203 = vunpack.c.l.b16 %v1195
        %v1204 = vpack.c.b16 %v1203, %v1203
        %1205 = vrot.lane.b32.xlu0 %v1204, 96
        %v1206 = vpop.permute.xlu0 %1205
        %v1208 = vsel %vm1135, %v1201, 0
        %v1211 = vsel %vm1135, %v1206, 0
        %1213 = vmatpush.bf16.xpose.msra.mxu0 0
        %1214 = vmatpush.bf16.xpose.msra.mxu0 0
        %1215 = vmatpush.bf16.xpose.msra.mxu0 0
        %1216 = vmatpush.bf16.xpose.msra.mxu0 0
        %1217 = vmatpush.bf16.xpose.msra.mxu0 0
        %1218 = vmatpush.bf16.xpose.msra.mxu0 0
        %1219 = vmatpush.bf16.xpose.msra.mxu0 0
        %1220 = vmatpush.bf16.xpose.msra.mxu0 %v1211
        %1221 = vmatmul.bf16.gmra.mxu0 %v1208
        %v1222 = vpop.f32.mrf.mxu0
        %v1223 = vadd.f32 0.0, %v1222
        %v1224 = vpop.f32.mrf.mxu0
        %1225 = vdwg.mxu0
        %v1226 = vmul.f32 %v1223, 0.17677669
        %v1227 = vadd.f32 %v1226, %v1157
        %v1228 = vsel %vm1160, %v1227, -inf
        %1229 = vmax.xlane.f32.xlu0 %v1228
        %v1230 = vpop.xlane.xlu0 %1229
        %v1231 = vsub.f32 %v1227, %v1230
        %v1232 = vmul.f32 %v1231, 1.442695
        %v1233 = vpow.pop %v1232
        %v1234 = vsel %vm1160, %v1233, 0.0
        %1235 = vadd.xlane.f32.xlu0 %v1234
        %v1236 = vpop.xlane.xlu0 %1235
        %v1237 = vrcp.pop %v1236
        %v1238 = vmul.f32 %v1233, %v1237
        %v1239 = vpack.c.bf16 %v1238, %v1238
        %v1241 = vunpack.c.l.b16 %v1196
        %v1242 = vpack.c.b16 %v1241, %v1241
        %1243 = vrot.lane.b32.xlu0 %v1242, 96
        %v1244 = vpop.permute.xlu0 %1243
        %v1246 = vsel %vm1160, %v1239, 0
        %v1249 = vsel %vm1176, %v1244, 0
        %1251 = vmatpush.bf16.msra.mxu0 0
        %1252 = vmatpush.bf16.msra.mxu0 0
        %1253 = vmatpush.bf16.msra.mxu0 0
        %1254 = vmatpush.bf16.msra.mxu0 0
        %1255 = vmatpush.bf16.msra.mxu0 0
        %1256 = vmatpush.bf16.msra.mxu0 0
        %1257 = vmatpush.bf16.msra.mxu0 0
        %1258 = vmatpush.bf16.msra.mxu0 %v1249
        %1259 = vmatmul.bf16.gmra.mxu0 %v1246
        %v1260 = vpop.f32.mrf.mxu0
        %v1261 = vadd.f32 0.0, %v1260
        %v1262 = vpop.f32.mrf.mxu0
        %1263 = vdwg.mxu0
        %1265 = vrot.lane.b32.xlu0 %v1261, 32
        %v1266 = vpop.permute.xlu0 %1265
        %vm1268 = vcmask 523520
        %1269 = vst.msk [vmem:[#allocation4] sm:$0xff] %vm1268, %v1266
        %v1270 = vld [vmem:[#allocation3] sm:$0xf]
        %v1271 = vld [vmem:[#allocation3 + $0x4] sm:$0xf]
        %v1272 = vld [vmem:[#allocation3 + $0x8] sm:$0xf]
        %v1274 = vunpack.c.l.b16 %v1270
        %v1275 = vpack.c.b16 %v1274, %v1274
        %1276 = vrot.lane.b32.xlu0 %v1275, 64
        %v1277 = vpop.permute.xlu0 %1276
        %v1279 = vunpack.c.l.b16 %v1271
        %v1280 = vpack.c.b16 %v1279, %v1279
        %1281 = vrot.lane.b32.xlu0 %v1280, 64
        %v1282 = vpop.permute.xlu0 %1281
        %v1284 = vsel %vm1135, %v1277, 0
        %v1287 = vsel %vm1135, %v1282, 0
        %1289 = vmatpush.bf16.xpose.msra.mxu0 0
        %1290 = vmatpush.bf16.xpose.msra.mxu0 0
        %1291 = vmatpush.bf16.xpose.msra.mxu0 0
        %1292 = vmatpush.bf16.xpose.msra.mxu0 0
        %1293 = vmatpush.bf16.xpose.msra.mxu0 0
        %1294 = vmatpush.bf16.xpose.msra.mxu0 0
        %1295 = vmatpush.bf16.xpose.msra.mxu0 0
        %1296 = vmatpush.bf16.xpose.msra.mxu0 %v1287
        %1297 = vmatmul.bf16.gmra.mxu0 %v1284
        %v1298 = vpop.f32.mrf.mxu0
        %v1299 = vadd.f32 0.0, %v1298
        %v1300 = vpop.f32.mrf.mxu0
        %1301 = vdwg.mxu0
        %v1302 = vmul.f32 %v1299, 0.17677669
        %v1303 = vadd.f32 %v1302, %v1157
        %v1304 = vsel %vm1160, %v1303, -inf
        %1305 = vmax.xlane.f32.xlu0 %v1304
        %v1306 = vpop.xlane.xlu0 %1305
        %v1307 = vsub.f32 %v1303, %v1306
        %v1308 = vmul.f32 %v1307, 1.442695
        %v1309 = vpow.pop %v1308
        %v1310 = vsel %vm1160, %v1309, 0.0
        %1311 = vadd.xlane.f32.xlu0 %v1310
        %v1312 = vpop.xlane.xlu0 %1311
        %v1313 = vrcp.pop %v1312
        %v1314 = vmul.f32 %v1309, %v1313
        %v1315 = vpack.c.bf16 %v1314, %v1314
        %v1317 = vunpack.c.l.b16 %v1272
        %v1318 = vpack.c.b16 %v1317, %v1317
        %1319 = vrot.lane.b32.xlu0 %v1318, 64
        %v1320 = vpop.permute.xlu0 %1319
        %v1322 = vsel %vm1160, %v1315, 0
        %v1325 = vsel %vm1176, %v1320, 0
        %1327 = vmatpush.bf16.msra.mxu0 0
        %1328 = vmatpush.bf16.msra.mxu0 0
        %1329 = vmatpush.bf16.msra.mxu0 0
        %1330 = vmatpush.bf16.msra.mxu0 0
        %1331 = vmatpush.bf16.msra.mxu0 0
        %1332 = vmatpush.bf16.msra.mxu0 0
        %1333 = vmatpush.bf16.msra.mxu0 0
        %1334 = vmatpush.bf16.msra.mxu0 %v1325
        %1335 = vmatmul.bf16.gmra.mxu0 %v1322
        %v1336 = vpop.f32.mrf.mxu0
        %v1337 = vadd.f32 0.0, %v1336
        %v1338 = vpop.f32.mrf.mxu0
        %1339 = vdwg.mxu0
        %1341 = vrot.lane.b32.xlu0 %v1337, 64
        %v1342 = vpop.permute.xlu0 %1341
        %vm1344 = vcmask 785920
        %1345 = vst.msk [vmem:[#allocation4] sm:$0xff] %vm1344, %v1342
        %v1346 = vld [vmem:[#allocation3] sm:$0xf]
        %v1347 = vld [vmem:[#allocation3 + $0x4] sm:$0xf]
        %v1348 = vld [vmem:[#allocation3 + $0x8] sm:$0xf]
        %v1350 = vunpack.c.l.b16 %v1346
        %v1351 = vpack.c.b16 %v1350, %v1350
        %1352 = vrot.lane.b32.xlu0 %v1351, 32
        %v1353 = vpop.permute.xlu0 %1352
        %v1355 = vunpack.c.l.b16 %v1347
        %v1356 = vpack.c.b16 %v1355, %v1355
        %1357 = vrot.lane.b32.xlu0 %v1356, 32
        %v1358 = vpop.permute.xlu0 %1357
        %v1360 = vsel %vm1135, %v1353, 0
        %v1363 = vsel %vm1135, %v1358, 0
        %1365 = vmatpush.bf16.xpose.msra.mxu0 0
        %1366 = vmatpush.bf16.xpose.msra.mxu0 0
        %1367 = vmatpush.bf16.xpose.msra.mxu0 0
        %1368 = vmatpush.bf16.xpose.msra.mxu0 0
        %1369 = vmatpush.bf16.xpose.msra.mxu0 0
        %1370 = vmatpush.bf16.xpose.msra.mxu0 0
        %1371 = vmatpush.bf16.xpose.msra.mxu0 0
        %1372 = vmatpush.bf16.xpose.msra.mxu0 %v1363
        %1373 = vmatmul.bf16.gmra.mxu0 %v1360
        %v1374 = vpop.f32.mrf.mxu0
        %v1375 = vadd.f32 0.0, %v1374
        %v1376 = vpop.f32.mrf.mxu0
        %1377 = vdwg.mxu0
        %v1378 = vmul.f32 %v1375, 0.17677669
        %v1379 = vadd.f32 %v1378, %v1157
        %v1380 = vsel %vm1160, %v1379, -inf
        %1381 = vmax.xlane.f32.xlu0 %v1380
        %v1382 = vpop.xlane.xlu0 %1381
        %v1383 = vsub.f32 %v1379, %v1382
        %v1384 = vmul.f32 %v1383, 1.442695
        %v1385 = vpow.pop %v1384
        %v1386 = vsel %vm1160, %v1385, 0.0
        %1387 = vadd.xlane.f32.xlu0 %v1386
        %v1388 = vpop.xlane.xlu0 %1387
        %v1389 = vrcp.pop %v1388
        %v1390 = vmul.f32 %v1385, %v1389
        %v1391 = vpack.c.bf16 %v1390, %v1390
        %v1393 = vunpack.c.l.b16 %v1348
        %v1394 = vpack.c.b16 %v1393, %v1393
        %1395 = vrot.lane.b32.xlu0 %v1394, 32
        %v1396 = vpop.permute.xlu0 %1395
        %v1398 = vsel %vm1160, %v1391, 0
        %v1401 = vsel %vm1176, %v1396, 0
        %1403 = vmatpush.bf16.msra.mxu0 0
        %1404 = vmatpush.bf16.msra.mxu0 0
        %1405 = vmatpush.bf16.msra.mxu0 0
        %1406 = vmatpush.bf16.msra.mxu0 0
        %1407 = vmatpush.bf16.msra.mxu0 0
        %1408 = vmatpush.bf16.msra.mxu0 0
        %1409 = vmatpush.bf16.msra.mxu0 0
        %1410 = vmatpush.bf16.msra.mxu0 %v1401
        %1411 = vmatmul.bf16.gmra.mxu0 %v1398
        %v1412 = vpop.f32.mrf.mxu0
        %v1413 = vadd.f32 0.0, %v1412
        %v1414 = vpop.f32.mrf.mxu0
        %1415 = vdwg.mxu0
        %1417 = vrot.lane.b32.xlu0 %v1413, 96
        %v1418 = vpop.permute.xlu0 %1417
        %vm1420 = vcmask 1048320
        %1421 = vst.msk [vmem:[#allocation4] sm:$0xff] %vm1420, %v1418
        %v1422 = vld [vmem:[#allocation4] sm:$0xff]
        %v1423 = vpack.c.bf16 %v1422, %v1422
        %v1424 = vld [vmem:[%s851] sm:$0xf]
        %v1425 = vld [vmem:[%s851 + $0x4] sm:$0xf]
        %v1426 = vld [vmem:[%s851 + $0x8] sm:$0xf]
        %v1427 = vld [vmem:[%s851 + $0xc] sm:$0xf]
        %v1428 = vld [vmem:[%s851 + $0x10] sm:$0xf]
        %v1429 = vld [vmem:[%s851 + $0x14] sm:$0xf]
        %v1430 = vld [vmem:[%s851 + $0x18] sm:$0xf]
        %v1431 = vld [vmem:[%s851 + $0x1c] sm:$0xf]
        %v1432 = vld [vmem:[%s851 + $0x20] sm:$0xf]
        %v1433 = vld [vmem:[%s851 + $0x24] sm:$0xf]
        %v1434 = vld [vmem:[%s851 + $0x28] sm:$0xf]
        %v1435 = vld [vmem:[%s851 + $0x2c] sm:$0xf]
        %v1436 = vld [vmem:[%s851 + $0x30] sm:$0xf]
        %v1437 = vld [vmem:[%s851 + $0x34] sm:$0xf]
        %v1438 = vld [vmem:[%s851 + $0x38] sm:$0xf]
        %v1439 = vld [vmem:[%s851 + $0x3c] sm:$0xf]
        %v1440 = vld [vmem:[%s854] sm:$0x1]
        %v1442 = vperm.slane %v1440, 0
        %v1460 = vunpack.c.l.b16 %v1424
        %v1461 = vunpack.c.l.b16 %v1425
        %v1462 = vunpack.c.l.b16 %v1426
        %v1463 = vunpack.c.l.b16 %v1427
        %v1464 = vunpack.c.l.b16 %v1428
        %v1465 = vunpack.c.l.b16 %v1429
        %v1466 = vunpack.c.l.b16 %v1430
        %v1467 = vunpack.c.l.b16 %v1431
        %v1468 = vunpack.c.l.b16 %v1432
        %v1469 = vunpack.c.l.b16 %v1433
        %v1470 = vunpack.c.l.b16 %v1434
        %v1471 = vunpack.c.l.b16 %v1435
        %v1472 = vunpack.c.l.b16 %v1436
        %v1473 = vunpack.c.l.b16 %v1437
        %v1474 = vunpack.c.l.b16 %v1438
        %v1475 = vunpack.c.l.b16 %v1439
        %v1476 = vpack.c.b16 %v1461, %v1460
        %v1477 = vpack.c.b16 %v1463, %v1462
        %v1478 = vpack.c.b16 %v1465, %v1464
        %v1479 = vpack.c.b16 %v1467, %v1466
        %v1480 = vpack.c.b16 %v1469, %v1468
        %v1481 = vpack.c.b16 %v1471, %v1470
        %v1482 = vpack.c.b16 %v1473, %v1472
        %v1483 = vpack.c.b16 %v1475, %v1474
        %1492 = vmatpush.bf16.msra.mxu0 %v1483
        %1493 = vmatpush.bf16.msra.mxu0 %v1482
        %1494 = vmatpush.bf16.msra.mxu0 %v1481
        %1495 = vmatpush.bf16.msra.mxu0 %v1480
        %1496 = vmatpush.bf16.msra.mxu0 %v1479
        %1497 = vmatpush.bf16.msra.mxu0 %v1478
        %1498 = vmatpush.bf16.msra.mxu0 %v1477
        %1499 = vmatpush.bf16.msra.mxu0 %v1476
        %1500 = vmatmul.bf16.gmra.mxu0 %v1423
        %v1501 = vpop.f32.mrf.mxu0
        %v1502 = vadd.f32 %v1442, %v1501
        %v1503 = vpop.f32.mrf.mxu0
        %1504 = vdwg.mxu0
        %v1505 = vadd.f32 %v1502, %v918
        %v1506 = vld [vmem:[%s857] sm:$0x1]
        %v1507 = vld [vmem:[%s860] sm:$0x1]
        %1508 = vadd.xlane.f32.xlu0 %v1505
        %v1509 = vpop.xlane.xlu0 %1508
        %v1510 = vrcp.pop 128.0
        %v1511 = vmul.f32 128.0, %v1510
        %v1512 = vsub.f32 1.0, %v1511
        %v1513 = vmul.f32 %v1510, %v1512
        %v1514 = vadd.f32 %v1510, %v1513
        %vm1515 = vweird.f32 %v1510
        %v1516 = vsel %vm1515, %v1510, %v1514
        %v1517 = vmul.f32 %v1509, %v1516
        %v1518 = vsub.f32 %v1505, %v1517
        %v1519 = vmul.f32 %v1518, %v1518
        %1520 = vadd.xlane.f32.xlu0 %v1519
        %v1521 = vpop.xlane.xlu0 %1520
        %v1522 = vmul.f32 %v1521, %v1516
        %v1523 = vadd.f32 %v1522, 1e-12
        %v1524 = vrsqrt.pop %v1523
        %v1525 = vmul.f32 %v1524, %v1523
        %v1526 = vmul.f32 %v1525, %v1524
        %v1527 = vmul.f32 0.5, %v1526
        %v1528 = vsub.f32 1.5, %v1527
        %v1529 = vmul.f32 %v1524, %v1528
        %vm1530 = vweird.f32 %v1523
        %vm1531 = vweird.f32 %v1524
        %vm1532 = vmor %vm1530, %vm1531
        %v1533 = vsel %vm1532, %v1524, %v1529
        %v1534 = vmul.f32 %v1518, %v1533
        %v1536 = vperm.slane %v1506, 0
        %v1538 = vmul.f32 %v1534, %v1536
        %v1540 = vperm.slane %v1507, 0
        %v1542 = vadd.f32 %v1538, %v1540
        %v1543 = vpack.c.bf16 %v1542, %v1542
        %v1544 = vld [vmem:[%s720] sm:$0xff]
        %v1545 = vld [vmem:[%s720 + $0x8] sm:$0xff]
        %v1546 = vld [vmem:[%s720 + $0x10] sm:$0xff]
        %v1547 = vld [vmem:[%s720 + $0x18] sm:$0xff]
        %v1548 = vld [vmem:[%s720 + $0x20] sm:$0xff]
        %v1549 = vld [vmem:[%s720 + $0x28] sm:$0xff]
        %v1550 = vld [vmem:[%s720 + $0x30] sm:$0xff]
        %v1551 = vld [vmem:[%s720 + $0x38] sm:$0xff]
        %v1552 = vld [vmem:[%s720 + $0x40] sm:$0xff]
        %v1553 = vld [vmem:[%s720 + $0x48] sm:$0xff]
        %v1554 = vld [vmem:[%s720 + $0x50] sm:$0xff]
        %v1555 = vld [vmem:[%s720 + $0x58] sm:$0xff]
        %v1556 = vld [vmem:[%s720 + $0x60] sm:$0xff]
        %v1557 = vld [vmem:[%s720 + $0x68] sm:$0xff]
        %v1558 = vld [vmem:[%s720 + $0x70] sm:$0xff]
        %v1559 = vld [vmem:[%s720 + $0x78] sm:$0xff]
        %v1560 = vld [vmem:[%s864] sm:$0x3]
        %v1562 = vperm.slane %v1560, 0
        %v1563 = vperm.slane %v1560, 1
        %v1582 = vunpack.c.l.b16 %v1544
        %v1583 = vunpack.c.h.b16 %v1544
        %v1584 = vunpack.c.l.b16 %v1545
        %v1585 = vunpack.c.h.b16 %v1545
        %v1586 = vunpack.c.l.b16 %v1546
        %v1587 = vunpack.c.h.b16 %v1546
        %v1588 = vunpack.c.l.b16 %v1547
        %v1589 = vunpack.c.h.b16 %v1547
        %v1590 = vunpack.c.l.b16 %v1548
        %v1591 = vunpack.c.h.b16 %v1548
        %v1592 = vunpack.c.l.b16 %v1549
        %v1593 = vunpack.c.h.b16 %v1549
        %v1594 = vunpack.c.l.b16 %v1550
        %v1595 = vunpack.c.h.b16 %v1550
        %v1596 = vunpack.c.l.b16 %v1551
        %v1597 = vunpack.c.h.b16 %v1551
        %v1598 = vunpack.c.l.b16 %v1552
        %v1599 = vunpack.c.h.b16 %v1552
        %v1600 = vunpack.c.l.b16 %v1553
        %v1601 = vunpack.c.h.b16 %v1553
        %v1602 = vunpack.c.l.b16 %v1554
        %v1603 = vunpack.c.h.b16 %v1554
        %v1604 = vunpack.c.l.b16 %v1555
        %v1605 = vunpack.c.h.b16 %v1555
        %v1606 = vunpack.c.l.b16 %v1556
        %v1607 = vunpack.c.h.b16 %v1556
        %v1608 = vunpack.c.l.b16 %v1557
        %v1609 = vunpack.c.h.b16 %v1557
        %v1610 = vunpack.c.l.b16 %v1558
        %v1611 = vunpack.c.h.b16 %v1558
        %v1612 = vunpack.c.l.b16 %v1559
        %v1613 = vunpack.c.h.b16 %v1559
        %v1614 = vpack.c.b16 %v1584, %v1582
        %v1615 = vpack.c.b16 %v1585, %v1583
        %v1616 = vpack.c.b16 %v1588, %v1586
        %v1617 = vpack.c.b16 %v1589, %v1587
        %v1618 = vpack.c.b16 %v1592, %v1590
        %v1619 = vpack.c.b16 %v1593, %v1591
        %v1620 = vpack.c.b16 %v1596, %v1594
        %v1621 = vpack.c.b16 %v1597, %v1595
        %v1622 = vpack.c.b16 %v1600, %v1598
        %v1623 = vpack.c.b16 %v1601, %v1599
        %v1624 = vpack.c.b16 %v1604, %v1602
        %v1625 = vpack.c.b16 %v1605, %v1603
        %v1626 = vpack.c.b16 %v1608, %v1606
        %v1627 = vpack.c.b16 %v1609, %v1607
        %v1628 = vpack.c.b16 %v1612, %v1610
        %v1629 = vpack.c.b16 %v1613, %v1611
        %1646 = vmatpush.bf16.msra.mxu0 %v1628
        %1647 = vmatpush.bf16.msra.mxu0 %v1626
        %1648 = vmatpush.bf16.msra.mxu0 %v1624
        %1649 = vmatpush.bf16.msra.mxu0 %v1622
        %1650 = vmatpush.bf16.msra.mxu0 %v1620
        %1651 = vmatpush.bf16.msra.mxu0 %v1618
        %1652 = vmatpush.bf16.msra.mxu0 %v1616
        %1653 = vmatpush.bf16.msra.mxu0 %v1614
        %1654 = vmatmul.bf16.gmra.mxu0 %v1543
        %v1655 = vpop.f32.mrf.mxu0
        %v1656 = vadd.f32 %v1562, %v1655
        %v1657 = vpop.f32.mrf.mxu0
        %1658 = vdwg.mxu0
        %1659 = vmatpush.bf16.msra.mxu0 %v1629
        %1660 = vmatpush.bf16.msra.mxu0 %v1627
        %1661 = vmatpush.bf16.msra.mxu0 %v1625
        %1662 = vmatpush.bf16.msra.mxu0 %v1623
        %1663 = vmatpush.bf16.msra.mxu0 %v1621
        %1664 = vmatpush.bf16.msra.mxu0 %v1619
        %1665 = vmatpush.bf16.msra.mxu0 %v1617
        %1666 = vmatpush.bf16.msra.mxu0 %v1615
        %1667 = vmatmul.bf16.gmra.mxu0 %v1543
        %v1668 = vpop.f32.mrf.mxu0
        %v1669 = vadd.f32 %v1563, %v1668
        %v1670 = vpop.f32.mrf.mxu0
        %1671 = vdwg.mxu0
        %v1672 = vmul.f32 %v1656, %v1656
        %v1673 = vmul.f32 %v1669, %v1669
        %v1674 = vmul.f32 %v1656, %v1672
        %v1675 = vmul.f32 %v1669, %v1673
        %v1676 = vmul.f32 %v1674, 0.044715
        %v1677 = vmul.f32 %v1675, 0.044715
        %v1678 = vadd.f32 %v1656, %v1676
        %v1679 = vadd.f32 %v1669, %v1677
        %v1680 = vmul.f32 %v1678, 0.7978846
        %v1681 = vmul.f32 %v1679, 0.7978846
        %v1682 = vtanh.pop %v1680
        %v1683 = vtanh.pop %v1681
        %v1684 = vadd.f32 %v1682, 1.0
        %v1685 = vadd.f32 %v1683, 1.0
        %v1686 = vmul.f32 %v1684, 0.5
        %v1687 = vmul.f32 %v1685, 0.5
        %v1688 = vmul.f32 %v1656, %v1686
        %v1689 = vmul.f32 %v1669, %v1687
        %v1690 = vpack.c.bf16 %v1688, %v1688
        %v1691 = vpack.c.bf16 %v1689, %v1689
        %v1692 = vld [vmem:[%s730] sm:$0xf]
        %v1693 = vld [vmem:[%s730 + $0x4] sm:$0xf]
        %v1694 = vld [vmem:[%s730 + $0x8] sm:$0xf]
        %v1695 = vld [vmem:[%s730 + $0xc] sm:$0xf]
        %v1696 = vld [vmem:[%s730 + $0x10] sm:$0xf]
        %v1697 = vld [vmem:[%s730 + $0x14] sm:$0xf]
        %v1698 = vld [vmem:[%s730 + $0x18] sm:$0xf]
        %v1699 = vld [vmem:[%s730 + $0x1c] sm:$0xf]
        %v1700 = vld [vmem:[%s730 + $0x20] sm:$0xf]
        %v1701 = vld [vmem:[%s730 + $0x24] sm:$0xf]
        %v1702 = vld [vmem:[%s730 + $0x28] sm:$0xf]
        %v1703 = vld [vmem:[%s730 + $0x2c] sm:$0xf]
        %v1704 = vld [vmem:[%s730 + $0x30] sm:$0xf]
        %v1705 = vld [vmem:[%s730 + $0x34] sm:$0xf]
        %v1706 = vld [vmem:[%s730 + $0x38] sm:$0xf]
        %v1707 = vld [vmem:[%s730 + $0x3c] sm:$0xf]
        %v1708 = vld [vmem:[%s730 + $0x40] sm:$0xf]
        %v1709 = vld [vmem:[%s730 + $0x44] sm:$0xf]
        %v1710 = vld [vmem:[%s730 + $0x48] sm:$0xf]
        %v1711 = vld [vmem:[%s730 + $0x4c] sm:$0xf]
        %v1712 = vld [vmem:[%s730 + $0x50] sm:$0xf]
        %v1713 = vld [vmem:[%s730 + $0x54] sm:$0xf]
        %v1714 = vld [vmem:[%s730 + $0x58] sm:$0xf]
        %v1715 = vld [vmem:[%s730 + $0x5c] sm:$0xf]
        %v1716 = vld [vmem:[%s730 + $0x60] sm:$0xf]
        %v1717 = vld [vmem:[%s730 + $0x64] sm:$0xf]
        %v1718 = vld [vmem:[%s730 + $0x68] sm:$0xf]
        %v1719 = vld [vmem:[%s730 + $0x6c] sm:$0xf]
        %v1720 = vld [vmem:[%s730 + $0x70] sm:$0xf]
        %v1721 = vld [vmem:[%s730 + $0x74] sm:$0xf]
        %v1722 = vld [vmem:[%s730 + $0x78] sm:$0xf]
        %v1723 = vld [vmem:[%s730 + $0x7c] sm:$0xf]
        %v1724 = vld [vmem:[%s867] sm:$0x1]
        %v1726 = vperm.slane %v1724, 0
        %v1760 = vunpack.c.l.b16 %v1692
        %v1761 = vunpack.c.l.b16 %v1693
        %v1762 = vunpack.c.l.b16 %v1694
        %v1763 = vunpack.c.l.b16 %v1695
        %v1764 = vunpack.c.l.b16 %v1696
        %v1765 = vunpack.c.l.b16 %v1697
        %v1766 = vunpack.c.l.b16 %v1698
        %v1767 = vunpack.c.l.b16 %v1699
        %v1768 = vunpack.c.l.b16 %v1700
        %v1769 = vunpack.c.l.b16 %v1701
        %v1770 = vunpack.c.l.b16 %v1702
        %v1771 = vunpack.c.l.b16 %v1703
        %v1772 = vunpack.c.l.b16 %v1704
        %v1773 = vunpack.c.l.b16 %v1705
        %v1774 = vunpack.c.l.b16 %v1706
        %v1775 = vunpack.c.l.b16 %v1707
        %v1776 = vunpack.c.l.b16 %v1708
        %v1777 = vunpack.c.l.b16 %v1709
        %v1778 = vunpack.c.l.b16 %v1710
        %v1779 = vunpack.c.l.b16 %v1711
        %v1780 = vunpack.c.l.b16 %v1712
        %v1781 = vunpack.c.l.b16 %v1713
        %v1782 = vunpack.c.l.b16 %v1714
        %v1783 = vunpack.c.l.b16 %v1715
        %v1784 = vunpack.c.l.b16 %v1716
        %v1785 = vunpack.c.l.b16 %v1717
        %v1786 = vunpack.c.l.b16 %v1718
        %v1787 = vunpack.c.l.b16 %v1719
        %v1788 = vunpack.c.l.b16 %v1720
        %v1789 = vunpack.c.l.b16 %v1721
        %v1790 = vunpack.c.l.b16 %v1722
        %v1791 = vunpack.c.l.b16 %v1723
        %v1792 = vpack.c.b16 %v1761, %v1760
        %v1793 = vpack.c.b16 %v1763, %v1762
        %v1794 = vpack.c.b16 %v1765, %v1764
        %v1795 = vpack.c.b16 %v1767, %v1766
        %v1796 = vpack.c.b16 %v1769, %v1768
        %v1797 = vpack.c.b16 %v1771, %v1770
        %v1798 = vpack.c.b16 %v1773, %v1772
        %v1799 = vpack.c.b16 %v1775, %v1774
        %v1800 = vpack.c.b16 %v1777, %v1776
        %v1801 = vpack.c.b16 %v1779, %v1778
        %v1802 = vpack.c.b16 %v1781, %v1780
        %v1803 = vpack.c.b16 %v1783, %v1782
        %v1804 = vpack.c.b16 %v1785, %v1784
        %v1805 = vpack.c.b16 %v1787, %v1786
        %v1806 = vpack.c.b16 %v1789, %v1788
        %v1807 = vpack.c.b16 %v1791, %v1790
        %1824 = vmatpush.bf16.msra.mxu0 %v1799
        %1825 = vmatpush.bf16.msra.mxu0 %v1798
        %1826 = vmatpush.bf16.msra.mxu0 %v1797
        %1827 = vmatpush.bf16.msra.mxu0 %v1796
        %1828 = vmatpush.bf16.msra.mxu0 %v1795
        %1829 = vmatpush.bf16.msra.mxu0 %v1794
        %1830 = vmatpush.bf16.msra.mxu0 %v1793
        %1831 = vmatpush.bf16.msra.mxu0 %v1792
        %1832 = vmatmul.bf16.gmra.mxu0 %v1690
        %v1833 = vpop.f32.mrf.mxu0
        %v1834 = vadd.f32 %v1726, %v1833
        %v1835 = vpop.f32.mrf.mxu0
        %1836 = vdwg.mxu0
        %1837 = vmatpush.bf16.msra.mxu0 %v1807
        %1838 = vmatpush.bf16.msra.mxu0 %v1806
        %1839 = vmatpush.bf16.msra.mxu0 %v1805
        %1840 = vmatpush.bf16.msra.mxu0 %v1804
        %1841 = vmatpush.bf16.msra.mxu0 %v1803
        %1842 = vmatpush.bf16.msra.mxu0 %v1802
        %1843 = vmatpush.bf16.msra.mxu0 %v1801
        %1844 = vmatpush.bf16.msra.mxu0 %v1800
        %1845 = vmatmul.bf16.gmra.mxu0 %v1691
        %v1846 = vpop.f32.mrf.mxu0
        %v1847 = vadd.f32 %v1834, %v1846
        %v1848 = vpop.f32.mrf.mxu0
        %1849 = vdwg.mxu0
        %v1850 = vadd.f32 %v1847, %v1542
        %v1851 = vld [vmem:[%s870] sm:$0x1]
        %v1852 = vld [vmem:[%s873] sm:$0x1]
        %1853 = vadd.xlane.f32.xlu0 %v1850
        %v1854 = vpop.xlane.xlu0 %1853
        %v1855 = vmul.f32 %v1854, %v1516
        %v1856 = vsub.f32 %v1850, %v1855
        %v1857 = vmul.f32 %v1856, %v1856
        %1858 = vadd.xlane.f32.xlu0 %v1857
        %v1859 = vpop.xlane.xlu0 %1858
        %v1860 = vmul.f32 %v1859, %v1516
        %v1861 = vadd.f32 %v1860, 1e-12
        %v1862 = vrsqrt.pop %v1861
        %v1863 = vmul.f32 %v1862, %v1861
        %v1864 = vmul.f32 %v1863, %v1862
        %v1865 = vmul.f32 0.5, %v1864
        %v1866 = vsub.f32 1.5, %v1865
        %v1867 = vmul.f32 %v1862, %v1866
        %vm1868 = vweird.f32 %v1861
        %vm1869 = vweird.f32 %v1862
        %vm1870 = vmor %vm1868, %vm1869
        %v1871 = vsel %vm1870, %v1862, %v1867
        %v1872 = vmul.f32 %v1856, %v1871
        %v1874 = vperm.slane %v1851, 0
        %v1876 = vmul.f32 %v1872, %v1874
        %v1878 = vperm.slane %v1852, 0
        %v1880 = vadd.f32 %v1876, %v1878
        %1881 = vst [vmem:[#allocation2] sm:$0xff] %v1880
        %p1882 = scmp.eq.s32.totalorder %s44, 1
        // Predicated region
        $region113: #{base_codex_clip_forward.3} parent=91 // pred_check
          %p1883 = pneg %p1882
        $region114: #{base_codex_clip_forward.3} parent=91 // pred_check_branch
          %1885 = sbr.rel (%p1883) target = $region116
        $region115: #{base_codex_clip_forward.3} parent=91 // pred_region
          %v1886 = vpack.c.bf16 %v1880, %v1880
          %v1887 = vld [vmem:[#allocation11] sm:$0xf]
          %v1888 = vld [vmem:[#allocation11 + $0x4] sm:$0xf]
          %v1889 = vld [vmem:[#allocation11 + $0x8] sm:$0xf]
          %v1890 = vld [vmem:[#allocation11 + $0xc] sm:$0xf]
          %v1891 = vld [vmem:[#allocation11 + $0x10] sm:$0xf]
          %v1892 = vld [vmem:[#allocation11 + $0x14] sm:$0xf]
          %v1893 = vld [vmem:[#allocation11 + $0x18] sm:$0xf]
          %v1894 = vld [vmem:[#allocation11 + $0x1c] sm:$0xf]
          %v1895 = vld [vmem:[#allocation11 + $0x20] sm:$0xf]
          %v1896 = vld [vmem:[#allocation11 + $0x24] sm:$0xf]
          %v1897 = vld [vmem:[#allocation11 + $0x28] sm:$0xf]
          %v1898 = vld [vmem:[#allocation11 + $0x2c] sm:$0xf]
          %v1899 = vld [vmem:[#allocation11 + $0x30] sm:$0xf]
          %v1900 = vld [vmem:[#allocation11 + $0x34] sm:$0xf]
          %v1901 = vld [vmem:[#allocation11 + $0x38] sm:$0xf]
          %v1902 = vld [vmem:[#allocation11 + $0x3c] sm:$0xf]
          %v1903 = vld [vmem:[%s17] sm:$0x1]
          %v1920 = vunpack.c.l.b16 %v1887
          %v1921 = vunpack.c.l.b16 %v1888
          %v1922 = vunpack.c.l.b16 %v1889
          %v1923 = vunpack.c.l.b16 %v1890
          %v1924 = vunpack.c.l.b16 %v1891
          %v1925 = vunpack.c.l.b16 %v1892
          %v1926 = vunpack.c.l.b16 %v1893
          %v1927 = vunpack.c.l.b16 %v1894
          %v1928 = vunpack.c.l.b16 %v1895
          %v1929 = vunpack.c.l.b16 %v1896
          %v1930 = vunpack.c.l.b16 %v1897
          %v1931 = vunpack.c.l.b16 %v1898
          %v1932 = vunpack.c.l.b16 %v1899
          %v1933 = vunpack.c.l.b16 %v1900
          %v1934 = vunpack.c.l.b16 %v1901
          %v1935 = vunpack.c.l.b16 %v1902
          %v1936 = vpack.c.b16 %v1921, %v1920
          %v1937 = vpack.c.b16 %v1923, %v1922
          %v1938 = vpack.c.b16 %v1925, %v1924
          %v1939 = vpack.c.b16 %v1927, %v1926
          %v1940 = vpack.c.b16 %v1929, %v1928
          %v1941 = vpack.c.b16 %v1931, %v1930
          %v1942 = vpack.c.b16 %v1933, %v1932
          %v1943 = vpack.c.b16 %v1935, %v1934
          %1952 = vmatpush.bf16.msra.mxu0 %v1943
          %1953 = vmatpush.bf16.msra.mxu0 %v1942
          %1954 = vmatpush.bf16.msra.mxu0 %v1941
          %1955 = vmatpush.bf16.msra.mxu0 %v1940
          %1956 = vmatpush.bf16.msra.mxu0 %v1939
          %1957 = vmatpush.bf16.msra.mxu0 %v1938
          %1958 = vmatpush.bf16.msra.mxu0 %v1937
          %1959 = vmatpush.bf16.msra.mxu0 %v1936
          %1960 = vmatmul.bf16.gmra.mxu0 %v1886
          %v1961 = vpop.f32.mrf.mxu0
          %v1962 = vadd.f32 %v1903, %v1961
          %v1963 = vpop.f32.mrf.mxu0
          %1964 = vdwg.mxu0
          %1965 = vst [vmem:[%s835] sm:$0x1] %v1962
        $region116: #{base_codex_clip_forward.3} parent=91 // pred_fallthru
          _
        %s1966 = sand.u32 %s507, 1
        %s1967 = scalar_lea.sflag [#allocation7], %s1966
        %s1968 = sand.u32 %s507, 1
        %s1969 = scalar_lea.vmem [#allocation13], %s1968
        // Predicated region
        $region117: #{base_codex_clip_forward.3} parent=91 // pred_check
          %p1970 = pneg %p517
        $region118: #{base_codex_clip_forward.3} parent=91 // pred_check_branch
          %1972 = sbr.rel (%p1970) target = $region120
        $region119: #{base_codex_clip_forward.3} parent=91 // pred_region
          %1974 = vsyncadd %s1967, 0
          %s1975 = scalar_lea.hbm %s18, %s43
          %s1977 = sshll.u32 %s1969, 4
          %s1978 = int_to_ptr.vmem [resolvable:$true] %s1977
          %s1979 = sshll.u32 %s1975, 4
          %s1980 = int_to_ptr.hbm [resolvable:$true] %s1979
          %1982 = dma.vmem_to_hbm [thread:$0]  %s1978, 16, %s1980, %s1967
        $region120: #{base_codex_clip_forward.3} parent=91 // pred_fallthru
          _
      $region92: #{base_codex_clip_forward.3} parent=5 // pred_fallthru
        _
      %p1983 = scmp.le.s32.totalorder 2, %s34
      // Predicated region
      $region121: #{base_codex_clip_forward.3} parent=5 // pred_check
        %p1984 = pneg %p1983
      $region122: #{base_codex_clip_forward.3} parent=5 // pred_check_branch
        %1986 = sbr.rel (%p1984) target = $region124
      $region123: #{base_codex_clip_forward.3} parent=5 // pred_region
        %s1987 = ssub.s32 %s34, 2
        // Predicated region
        $region125: #{base_codex_clip_forward.3} parent=123 // pred_check
          %p1988 = pneg %p523
        $region126: #{base_codex_clip_forward.3} parent=123 // pred_check_branch
          %1990 = sbr.rel (%p1988) target = $region128
        $region127: #{base_codex_clip_forward.3} parent=123 // pred_region
          %s1991 = sand.u32 %s508, 1
          %s1992 = scalar_lea.sflag [#allocation7], %s1991
          %s1993 = sand.u32 %s508, 1
          %s1994 = scalar_lea.vmem [#allocation13], %s1993
          %1996 = dma.done %s1992, 16
        $region128: #{base_codex_clip_forward.3} parent=123 // pred_fallthru
          _
      $region124: #{base_codex_clip_forward.3} parent=5 // pred_fallthru
        _
    $region6: #{base_codex_clip_forward.3} parent=1 // loop_footer
      %s38 = sadd.s32 1, %s34
    $region7: #{base_codex_clip_forward.3} parent=1 // loop_footer_branch
      %33 = sbr.rel target = $region3
    $region8: #{base_codex_clip_forward.3} parent=1 // loop_exit
      _
    %1997 = vsyncpa [#allocation6], 1
    %s1998 = scalar_lea.sflag [#allocation6], 1
    %1999 = vsyncpa %s1998, 1
    %2000 = vsyncpa [#allocation9], 1
    %s2001 = scalar_lea.sflag [#allocation9], 1
    %2002 = vsyncpa %s2001, 1
    %2003 = vsyncpa [#allocation12], 1
    %2004 = vsyncpa [#allocation7], 1
    %s2005 = scalar_lea.sflag [#allocation7], 1
    %2006 = vsyncpa %s2005, 1

</llo_original>
